<compile_context>
chip_gen: v7x
topology: tpu7x:2x2x1
jax: 0.10.0
libtpu: 0.0.40
codegen_flags: <defaults>
</compile_context>

<pallas_src>
import jax
import jax.numpy as jnp
from jax import lax
from jax.experimental import pallas as pl
from jax.experimental.pallas import tpu as pltpu


# ---------------------------------------------------------------------------
# Fused Pallas kernel: stacked LSTM + final Linear
# ---------------------------------------------------------------------------
def _lstm_predictor_kernel(*refs):
    """refs = (x_ref [B,T,F],
               wih_0 [F,4H],  whh_0 [H,4H],  b_0 [1,4H],
               ...                                  (3 refs per layer)
               wih_L [H,4H],  whh_L [H,4H],  b_L [1,4H],
               fcw [H,out],   fcb [1,out],
               o_ref [B,P,out],
               hs_scr [T*B,H]  (VMEM scratch, layer handoff))"""
    x_ref = refs[0]
    fcw_ref, fcb_ref, o_ref, hs_scr = refs[-4], refs[-3], refs[-2], refs[-1]
    layer_refs = refs[1:-4]
    num_layers = len(layer_refs) // 3

    B, T, Fin = x_ref.shape
    P, out_f = o_ref.shape[1], o_ref.shape[2]
    H = layer_refs[1].shape[0]                     # whh_0: [H, 4H]

    def run_layer(gx_at, whh):
        """Recurrence given per-step precomputed input gates gx_at(t) [B,4H].
        Writes every hidden state into hs_scr (time-major rows)."""
        h = jnp.zeros((B, H), jnp.float32)
        c = jnp.zeros((B, H), jnp.float32)
        for t in range(T):                         # fully unrolled, static idx
            gates = gx_at(t) + jnp.dot(h, whh,
                                       preferred_element_type=jnp.float32)
            sig = jax.nn.sigmoid(gates)            # one full-width EUP pass
            tnh = jnp.tanh(gates)                  # one full-width EUP pass
            i_g = sig[:, 0 * H:1 * H]
            f_g = sig[:, 1 * H:2 * H]
            g_g = tnh[:, 2 * H:3 * H]
            o_g = sig[:, 3 * H:4 * H]
            c = f_g * c + i_g * g_g
            h = o_g * jnp.tanh(c)
            hs_scr[t * B:(t + 1) * B, :] = h       # stays in VMEM (no HBM)

    # ---- Layer 0: whole-sequence input->gate matmul (one MXU op). ---------
    wih = layer_refs[0][...]
    whh = layer_refs[1][...]
    b = layer_refs[2][...]
    gx = jnp.dot(x_ref[...].reshape(B * T, Fin), wih,
                 preferred_element_type=jnp.float32) + b       # [B*T, 4H]
    gx = gx.reshape(B, T, 4 * H)
    run_layer(lambda t: gx[:, t, :], whh)

    # ---- Layers 1..L-1: full input sequence now sits in hs_scr. -----------
    for l in range(1, num_layers):
        wih = layer_refs[3 * l + 0][...]
        whh = layer_refs[3 * l + 1][...]
        b = layer_refs[3 * l + 2][...]
        seq = hs_scr[...]                                      # [T*B, H] t-major
        gx = jnp.dot(seq, wih, preferred_element_type=jnp.float32) + b
        run_layer(lambda t, gx=gx: gx[t * B:(t + 1) * B, :], whh)

    # ---- Final Linear on the last P hidden states (one batched matmul). ---
    last = hs_scr[(T - P) * B:T * B, :]                        # [P*B, H]
    y = (jnp.dot(last, fcw_ref[...], preferred_element_type=jnp.float32)
         + fcb_ref[...])                                       # [P*B, out]
    for p in range(P):                                         # static stores
        o_ref[:, p:p + 1, :] = y[p * B:(p + 1) * B, :].reshape(B, 1, out_f)


# ---------------------------------------------------------------------------
# pallas_call wrapper (single fused call, everything VMEM-resident)
# ---------------------------------------------------------------------------
def lstm_predictor_forward(x, params, pred_steps):
    """x: [B, T, F] float32 (batch_first, like the PyTorch module).
    Returns: [B, pred_steps, output_features]."""
    B, T, _ = x.shape
    H = params["lstm"][0]["whh_t"].shape[0]
    out_f = params["fc_w_t"].shape[1]

    args = [x.astype(jnp.float32)]
    for layer in params["lstm"]:
        args += [layer["wih_t"], layer["whh_t"], layer["b"]]
    args += [params["fc_w_t"], params["fc_b"]]

    return pl.pallas_call(
        _lstm_predictor_kernel,
        out_shape=jax.ShapeDtypeStruct((B, pred_steps, out_f), jnp.float32),
        in_specs=[pl.BlockSpec(memory_space=pltpu.MemorySpace.VMEM)] * len(args),
        out_specs=pl.BlockSpec(memory_space=pltpu.MemorySpace.VMEM),
        scratch_shapes=[pltpu.VMEM((T * B, H), jnp.float32)],
        compiler_params=pltpu.CompilerParams(
            vmem_limit_bytes=32 * 1024 * 1024),
    )(*args)


# ---------------------------------------------------------------------------
# Parameter init (deterministic; mimics PyTorch's U(-1/sqrt(H), 1/sqrt(H)))
# ---------------------------------------------------------------------------
def init_params(key, input_features, hidden_dim, layer_dim, output_features):
    params = {"lstm": []}
    k = 1.0 / float(jnp.sqrt(hidden_dim))
    for l in range(layer_dim):
        din = input_features if l == 0 else hidden_dim
        key, k1, k2, k3, k4 = jax.random.split(key, 5)
        wih = jax.random.uniform(k1, (4 * hidden_dim, din), jnp.float32, -k, k)
        whh = jax.random.uniform(k2, (4 * hidden_dim, hidden_dim), jnp.float32, -k, k)
        bih = jax.random.uniform(k3, (4 * hidden_dim,), jnp.float32, -k, k)
        bhh = jax.random.uniform(k4, (4 * hidden_dim,), jnp.float32, -k, k)
        params["lstm"].append({
            "wih_t": wih.T,                 # [Din, 4H]
            "whh_t": whh.T,                 # [H, 4H]
            "b": (bih + bhh)[None, :],      # [1, 4H]
        })
    key, k1, k2 = jax.random.split(key, 3)
    fcw = jax.random.uniform(k1, (output_features, hidden_dim), jnp.float32, -k, k)
    fcb = jax.random.uniform(k2, (output_features,), jnp.float32, -k, k)
    params["fc_w_t"] = fcw.T                # [H, out]
    params["fc_b"] = fcb[None, :]           # [1, out]
    return params


# ---------------------------------------------------------------------------
# Pure-JAX reference (mirrors PyTorch nn.LSTM + nn.Linear semantics)
# ---------------------------------------------------------------------------
def reference_forward(x, params, pred_steps):
    B, T, _ = x.shape
    h = jnp.transpose(x, (1, 0, 2)).astype(jnp.float32)        # [T, B, F]
    for layer in params["lstm"]:
        H = layer["whh_t"].shape[0]
        wih_t, whh_t, b = layer["wih_t"], layer["whh_t"], layer["b"]

        def step(carry, x_t, wih_t=wih_t, whh_t=whh_t, b=b, H=H):
            hh, cc = carry
            gates = x_t @ wih_t + hh @ whh_t + b
            i = jax.nn.sigmoid(gates[:, :H])
            f = jax.nn.sigmoid(gates[:, H:2 * H])
            g = jnp.tanh(gates[:, 2 * H:3 * H])
            o = jax.nn.sigmoid(gates[:, 3 * H:])
            cc = f * cc + i * g
            hh = o * jnp.tanh(cc)
            return (hh, cc), hh

        init = (jnp.zeros((B, H), jnp.float32), jnp.zeros((B, H), jnp.float32))
        _, h = lax.scan(step, init, h)
    hs = jnp.transpose(h, (1, 0, 2))                            # [B, T, H]
    last = hs[:, T - pred_steps:, :].reshape(B * pred_steps, -1)
    return (last @ params["fc_w_t"] + params["fc_b"]).reshape(B, pred_steps, -1)


if __name__ == "__main__":
    # Small shapes consistent with the module's forward
    B, T = 2, 8
    input_features, hidden_dim, layer_dim = 4, 32, 2
    output_features, pred_steps = 1, 1

    key = jax.random.PRNGKey(0)
    key, kx, kp = jax.random.split(key, 3)
    x = jax.random.normal(kx, (B, T, input_features), jnp.float32)
    params = init_params(kp, input_features, hidden_dim, layer_dim, output_features)

    out = lstm_predictor_forward(x, params, pred_steps)
    out = jax.block_until_ready(out)
    assert out.shape == (B, pred_steps, output_features), out.shape

    ref = jax.block_until_ready(reference_forward(x, params, pred_steps))
    assert jnp.allclose(out, ref, atol=1e-4, rtol=1e-4), (out, ref)

    print("KERNEL_OK")
</pallas_src>

<mosaic_0001>
module attributes {stable_mosaic.version = 11 : i64} {
  func.func @_lstm_predictor_kernel(%arg0: memref<2x8x4xf32, #tpu.memory_space<vmem>>, %arg1: memref<4x128xf32, #tpu.memory_space<vmem>>, %arg2: memref<32x128xf32, #tpu.memory_space<vmem>>, %arg3: memref<1x128xf32, #tpu.memory_space<vmem>>, %arg4: memref<32x128xf32, #tpu.memory_space<vmem>>, %arg5: memref<32x128xf32, #tpu.memory_space<vmem>>, %arg6: memref<1x128xf32, #tpu.memory_space<vmem>>, %arg7: memref<32x1xf32, #tpu.memory_space<vmem>>, %arg8: memref<1x1xf32, #tpu.memory_space<vmem>>, %arg9: memref<2x1x1xf32, #tpu.memory_space<vmem>>, %arg10: memref<16x32xf32, #tpu.memory_space<vmem>>) attributes {dimension_semantics = [], scalar_prefetch = 0 : i64, scratch_operands = 1 : i64, tpu.core_type = #tpu.core_type<tc>} {
    %c0 = arith.constant 0 : index
    %c0_0 = arith.constant 0 : index
    %0 = vector.load %arg1[%c0, %c0_0] : memref<4x128xf32, #tpu.memory_space<vmem>>, vector<4x128xf32>
    %c0_1 = arith.constant 0 : index
    %c0_2 = arith.constant 0 : index
    %1 = vector.load %arg2[%c0_1, %c0_2] : memref<32x128xf32, #tpu.memory_space<vmem>>, vector<32x128xf32>
    %c0_3 = arith.constant 0 : index
    %c0_4 = arith.constant 0 : index
    %2 = vector.load %arg3[%c0_3, %c0_4] : memref<1x128xf32, #tpu.memory_space<vmem>>, vector<1x128xf32>
    %c0_5 = arith.constant 0 : index
    %c0_6 = arith.constant 0 : index
    %c0_7 = arith.constant 0 : index
    %3 = vector.load %arg0[%c0_5, %c0_6, %c0_7] : memref<2x8x4xf32, #tpu.memory_space<vmem>>, vector<2x8x4xf32>
    %4 = vector.shape_cast %3 : vector<2x8x4xf32> to vector<16x4xf32>
    %cst = arith.constant dense<0.000000e+00> : vector<16x128xf32>
    %5 = tpu.matmul %4, %0, %cst {dimension_numbers = #tpu.dot_dimension_numbers<[1], [0], [0], [1], [0, 0, 1, 1], [], []>} : vector<16x4xf32>, vector<4x128xf32>, vector<16x128xf32> -> vector<16x128xf32>
    %6 = vector.broadcast %2 : vector<1x128xf32> to vector<16x128xf32>
    %7 = arith.addf %5, %6 : vector<16x128xf32>
    %8 = vector.shape_cast %7 : vector<16x128xf32> to vector<2x8x128xf32>
    %cst_8 = arith.constant 0.000000e+00 : f32
    %9 = vector.broadcast %cst_8 : f32 to vector<2x32xf32>
    %cst_9 = arith.constant 0.000000e+00 : f32
    %10 = vector.broadcast %cst_9 : f32 to vector<2x32xf32>
    %11 = vector.extract_strided_slice %8 {offsets = [0, 0, 0], sizes = [2, 1, 128], strides = [1, 1, 1]} : vector<2x8x128xf32> to vector<2x1x128xf32>
    %12 = vector.shape_cast %11 : vector<2x1x128xf32> to vector<2x128xf32>
    %cst_10 = arith.constant dense<0.000000e+00> : vector<2x128xf32>
    %13 = tpu.matmul %9, %1, %cst_10 {dimension_numbers = #tpu.dot_dimension_numbers<[1], [0], [0], [1], [0, 0, 1, 1], [], []>} : vector<2x32xf32>, vector<32x128xf32>, vector<2x128xf32> -> vector<2x128xf32>
    %14 = arith.addf %12, %13 : vector<2x128xf32>
    %15 = arith.negf %14 : vector<2x128xf32>
    %16 = math.exp %15 : vector<2x128xf32>
    %cst_11 = arith.constant 1.000000e+00 : f32
    %17 = vector.broadcast %cst_11 : f32 to vector<2x128xf32>
    %18 = arith.addf %17, %16 : vector<2x128xf32>
    %19 = arith.divf %17, %18 : vector<2x128xf32>
    %20 = math.tanh %14 : vector<2x128xf32>
    %21 = vector.extract_strided_slice %19 {offsets = [0, 0], sizes = [2, 32], strides = [1, 1]} : vector<2x128xf32> to vector<2x32xf32>
    %22 = vector.extract_strided_slice %19 {offsets = [0, 32], sizes = [2, 32], strides = [1, 1]} : vector<2x128xf32> to vector<2x32xf32>
    %23 = vector.extract_strided_slice %20 {offsets = [0, 64], sizes = [2, 32], strides = [1, 1]} : vector<2x128xf32> to vector<2x32xf32>
    %24 = vector.extract_strided_slice %19 {offsets = [0, 96], sizes = [2, 32], strides = [1, 1]} : vector<2x128xf32> to vector<2x32xf32>
    %25 = arith.mulf %22, %10 : vector<2x32xf32>
    %26 = arith.mulf %21, %23 : vector<2x32xf32>
    %27 = arith.addf %25, %26 : vector<2x32xf32>
    %28 = math.tanh %27 : vector<2x32xf32>
    %29 = arith.mulf %24, %28 : vector<2x32xf32>
    %c0_12 = arith.constant 0 : index
    %c0_13 = arith.constant 0 : index
    %30 = vector.load %arg10[%c0_12, %c0_13] : memref<16x32xf32, #tpu.memory_space<vmem>>, vector<2x32xf32>
    tpu.vector_store %arg10[%c0_12, %c0_13], %29 {strides = array<i32>} : memref<16x32xf32, #tpu.memory_space<vmem>>, vector<2x32xf32>,
    %31 = vector.extract_strided_slice %8 {offsets = [0, 1, 0], sizes = [2, 1, 128], strides = [1, 1, 1]} : vector<2x8x128xf32> to vector<2x1x128xf32>
    %32 = vector.shape_cast %31 : vector<2x1x128xf32> to vector<2x128xf32>
    %cst_14 = arith.constant dense<0.000000e+00> : vector<2x128xf32>
    %33 = tpu.matmul %29, %1, %cst_14 {dimension_numbers = #tpu.dot_dimension_numbers<[1], [0], [0], [1], [0, 0, 1, 1], [], []>} : vector<2x32xf32>, vector<32x128xf32>, vector<2x128xf32> -> vector<2x128xf32>
    %34 = arith.addf %32, %33 : vector<2x128xf32>
    %35 = arith.negf %34 : vector<2x128xf32>
    %36 = math.exp %35 : vector<2x128xf32>
    %cst_15 = arith.constant 1.000000e+00 : f32
    %37 = vector.broadcast %cst_15 : f32 to vector<2x128xf32>
    %38 = arith.addf %37, %36 : vector<2x128xf32>
    %39 = arith.divf %37, %38 : vector<2x128xf32>
    %40 = math.tanh %34 : vector<2x128xf32>
    %41 = vector.extract_strided_slice %39 {offsets = [0, 0], sizes = [2, 32], strides = [1, 1]} : vector<2x128xf32> to vector<2x32xf32>
    %42 = vector.extract_strided_slice %39 {offsets = [0, 32], sizes = [2, 32], strides = [1, 1]} : vector<2x128xf32> to vector<2x32xf32>
    %43 = vector.extract_strided_slice %40 {offsets = [0, 64], sizes = [2, 32], strides = [1, 1]} : vector<2x128xf32> to vector<2x32xf32>
    %44 = vector.extract_strided_slice %39 {offsets = [0, 96], sizes = [2, 32], strides = [1, 1]} : vector<2x128xf32> to vector<2x32xf32>
    %45 = arith.mulf %42, %27 : vector<2x32xf32>
    %46 = arith.mulf %41, %43 : vector<2x32xf32>
    %47 = arith.addf %45, %46 : vector<2x32xf32>
    %48 = math.tanh %47 : vector<2x32xf32>
    %49 = arith.mulf %44, %48 : vector<2x32xf32>
    %c2 = arith.constant 2 : index
    %c0_16 = arith.constant 0 : index
    %50 = vector.load %arg10[%c2, %c0_16] : memref<16x32xf32, #tpu.memory_space<vmem>>, vector<2x32xf32>
    tpu.vector_store %arg10[%c2, %c0_16], %49 {strides = array<i32>} : memref<16x32xf32, #tpu.memory_space<vmem>>, vector<2x32xf32>,
    %51 = vector.extract_strided_slice %8 {offsets = [0, 2, 0], sizes = [2, 1, 128], strides = [1, 1, 1]} : vector<2x8x128xf32> to vector<2x1x128xf32>
    %52 = vector.shape_cast %51 : vector<2x1x128xf32> to vector<2x128xf32>
    %cst_17 = arith.constant dense<0.000000e+00> : vector<2x128xf32>
    %53 = tpu.matmul %49, %1, %cst_17 {dimension_numbers = #tpu.dot_dimension_numbers<[1], [0], [0], [1], [0, 0, 1, 1], [], []>} : vector<2x32xf32>, vector<32x128xf32>, vector<2x128xf32> -> vector<2x128xf32>
    %54 = arith.addf %52, %53 : vector<2x128xf32>
    %55 = arith.negf %54 : vector<2x128xf32>
    %56 = math.exp %55 : vector<2x128xf32>
    %cst_18 = arith.constant 1.000000e+00 : f32
    %57 = vector.broadcast %cst_18 : f32 to vector<2x128xf32>
    %58 = arith.addf %57, %56 : vector<2x128xf32>
    %59 = arith.divf %57, %58 : vector<2x128xf32>
    %60 = math.tanh %54 : vector<2x128xf32>
    %61 = vector.extract_strided_slice %59 {offsets = [0, 0], sizes = [2, 32], strides = [1, 1]} : vector<2x128xf32> to vector<2x32xf32>
    %62 = vector.extract_strided_slice %59 {offsets = [0, 32], sizes = [2, 32], strides = [1, 1]} : vector<2x128xf32> to vector<2x32xf32>
    %63 = vector.extract_strided_slice %60 {offsets = [0, 64], sizes = [2, 32], strides = [1, 1]} : vector<2x128xf32> to vector<2x32xf32>
    %64 = vector.extract_strided_slice %59 {offsets = [0, 96], sizes = [2, 32], strides = [1, 1]} : vector<2x128xf32> to vector<2x32xf32>
    %65 = arith.mulf %62, %47 : vector<2x32xf32>
    %66 = arith.mulf %61, %63 : vector<2x32xf32>
    %67 = arith.addf %65, %66 : vector<2x32xf32>
    %68 = math.tanh %67 : vector<2x32xf32>
    %69 = arith.mulf %64, %68 : vector<2x32xf32>
    %c4 = arith.constant 4 : index
    %c0_19 = arith.constant 0 : index
    %70 = vector.load %arg10[%c4, %c0_19] : memref<16x32xf32, #tpu.memory_space<vmem>>, vector<2x32xf32>
    tpu.vector_store %arg10[%c4, %c0_19], %69 {strides = array<i32>} : memref<16x32xf32, #tpu.memory_space<vmem>>, vector<2x32xf32>,
    %71 = vector.extract_strided_slice %8 {offsets = [0, 3, 0], sizes = [2, 1, 128], strides = [1, 1, 1]} : vector<2x8x128xf32> to vector<2x1x128xf32>
    %72 = vector.shape_cast %71 : vector<2x1x128xf32> to vector<2x128xf32>
    %cst_20 = arith.constant dense<0.000000e+00> : vector<2x128xf32>
    %73 = tpu.matmul %69, %1, %cst_20 {dimension_numbers = #tpu.dot_dimension_numbers<[1], [0], [0], [1], [0, 0, 1, 1], [], []>} : vector<2x32xf32>, vector<32x128xf32>, vector<2x128xf32> -> vector<2x128xf32>
    %74 = arith.addf %72, %73 : vector<2x128xf32>
    %75 = arith.negf %74 : vector<2x128xf32>
    %76 = math.exp %75 : vector<2x128xf32>
    %cst_21 = arith.constant 1.000000e+00 : f32
    %77 = vector.broadcast %cst_21 : f32 to vector<2x128xf32>
    %78 = arith.addf %77, %76 : vector<2x128xf32>
    %79 = arith.divf %77, %78 : vector<2x128xf32>
    %80 = math.tanh %74 : vector<2x128xf32>
    %81 = vector.extract_strided_slice %79 {offsets = [0, 0], sizes = [2, 32], strides = [1, 1]} : vector<2x128xf32> to vector<2x32xf32>
    %82 = vector.extract_strided_slice %79 {offsets = [0, 32], sizes = [2, 32], strides = [1, 1]} : vector<2x128xf32> to vector<2x32xf32>
    %83 = vector.extract_strided_slice %80 {offsets = [0, 64], sizes = [2, 32], strides = [1, 1]} : vector<2x128xf32> to vector<2x32xf32>
    %84 = vector.extract_strided_slice %79 {offsets = [0, 96], sizes = [2, 32], strides = [1, 1]} : vector<2x128xf32> to vector<2x32xf32>
    %85 = arith.mulf %82, %67 : vector<2x32xf32>
    %86 = arith.mulf %81, %83 : vector<2x32xf32>
    %87 = arith.addf %85, %86 : vector<2x32xf32>
    %88 = math.tanh %87 : vector<2x32xf32>
    %89 = arith.mulf %84, %88 : vector<2x32xf32>
    %c6 = arith.constant 6 : index
    %c0_22 = arith.constant 0 : index
    %90 = vector.load %arg10[%c6, %c0_22] : memref<16x32xf32, #tpu.memory_space<vmem>>, vector<2x32xf32>
    tpu.vector_store %arg10[%c6, %c0_22], %89 {strides = array<i32>} : memref<16x32xf32, #tpu.memory_space<vmem>>, vector<2x32xf32>,
    %91 = vector.extract_strided_slice %8 {offsets = [0, 4, 0], sizes = [2, 1, 128], strides = [1, 1, 1]} : vector<2x8x128xf32> to vector<2x1x128xf32>
    %92 = vector.shape_cast %91 : vector<2x1x128xf32> to vector<2x128xf32>
    %cst_23 = arith.constant dense<0.000000e+00> : vector<2x128xf32>
    %93 = tpu.matmul %89, %1, %cst_23 {dimension_numbers = #tpu.dot_dimension_numbers<[1], [0], [0], [1], [0, 0, 1, 1], [], []>} : vector<2x32xf32>, vector<32x128xf32>, vector<2x128xf32> -> vector<2x128xf32>
    %94 = arith.addf %92, %93 : vector<2x128xf32>
    %95 = arith.negf %94 : vector<2x128xf32>
    %96 = math.exp %95 : vector<2x128xf32>
    %cst_24 = arith.constant 1.000000e+00 : f32
    %97 = vector.broadcast %cst_24 : f32 to vector<2x128xf32>
    %98 = arith.addf %97, %96 : vector<2x128xf32>
    %99 = arith.divf %97, %98 : vector<2x128xf32>
    %100 = math.tanh %94 : vector<2x128xf32>
    %101 = vector.extract_strided_slice %99 {offsets = [0, 0], sizes = [2, 32], strides = [1, 1]} : vector<2x128xf32> to vector<2x32xf32>
    %102 = vector.extract_strided_slice %99 {offsets = [0, 32], sizes = [2, 32], strides = [1, 1]} : vector<2x128xf32> to vector<2x32xf32>
    %103 = vector.extract_strided_slice %100 {offsets = [0, 64], sizes = [2, 32], strides = [1, 1]} : vector<2x128xf32> to vector<2x32xf32>
    %104 = vector.extract_strided_slice %99 {offsets = [0, 96], sizes = [2, 32], strides = [1, 1]} : vector<2x128xf32> to vector<2x32xf32>
    %105 = arith.mulf %102, %87 : vector<2x32xf32>
    %106 = arith.mulf %101, %103 : vector<2x32xf32>
    %107 = arith.addf %105, %106 : vector<2x32xf32>
    %108 = math.tanh %107 : vector<2x32xf32>
    %109 = arith.mulf %104, %108 : vector<2x32xf32>
    %c8 = arith.constant 8 : index
    %c0_25 = arith.constant 0 : index
    %110 = vector.load %arg10[%c8, %c0_25] : memref<16x32xf32, #tpu.memory_space<vmem>>, vector<2x32xf32>
    tpu.vector_store %arg10[%c8, %c0_25], %109 {strides = array<i32>} : memref<16x32xf32, #tpu.memory_space<vmem>>, vector<2x32xf32>,
    %111 = vector.extract_strided_slice %8 {offsets = [0, 5, 0], sizes = [2, 1, 128], strides = [1, 1, 1]} : vector<2x8x128xf32> to vector<2x1x128xf32>
    %112 = vector.shape_cast %111 : vector<2x1x128xf32> to vector<2x128xf32>
    %cst_26 = arith.constant dense<0.000000e+00> : vector<2x128xf32>
    %113 = tpu.matmul %109, %1, %cst_26 {dimension_numbers = #tpu.dot_dimension_numbers<[1], [0], [0], [1], [0, 0, 1, 1], [], []>} : vector<2x32xf32>, vector<32x128xf32>, vector<2x128xf32> -> vector<2x128xf32>
    %114 = arith.addf %112, %113 : vector<2x128xf32>
    %115 = arith.negf %114 : vector<2x128xf32>
    %116 = math.exp %115 : vector<2x128xf32>
    %cst_27 = arith.constant 1.000000e+00 : f32
    %117 = vector.broadcast %cst_27 : f32 to vector<2x128xf32>
    %118 = arith.addf %117, %116 : vector<2x128xf32>
    %119 = arith.divf %117, %118 : vector<2x128xf32>
    %120 = math.tanh %114 : vector<2x128xf32>
    %121 = vector.extract_strided_slice %119 {offsets = [0, 0], sizes = [2, 32], strides = [1, 1]} : vector<2x128xf32> to vector<2x32xf32>
    %122 = vector.extract_strided_slice %119 {offsets = [0, 32], sizes = [2, 32], strides = [1, 1]} : vector<2x128xf32> to vector<2x32xf32>
    %123 = vector.extract_strided_slice %120 {offsets = [0, 64], sizes = [2, 32], strides = [1, 1]} : vector<2x128xf32> to vector<2x32xf32>
    %124 = vector.extract_strided_slice %119 {offsets = [0, 96], sizes = [2, 32], strides = [1, 1]} : vector<2x128xf32> to vector<2x32xf32>
    %125 = arith.mulf %122, %107 : vector<2x32xf32>
    %126 = arith.mulf %121, %123 : vector<2x32xf32>
    %127 = arith.addf %125, %126 : vector<2x32xf32>
    %128 = math.tanh %127 : vector<2x32xf32>
    %129 = arith.mulf %124, %128 : vector<2x32xf32>
    %c10 = arith.constant 10 : index
    %c0_28 = arith.constant 0 : index
    %130 = vector.load %arg10[%c10, %c0_28] : memref<16x32xf32, #tpu.memory_space<vmem>>, vector<2x32xf32>
    tpu.vector_store %arg10[%c10, %c0_28], %129 {strides = array<i32>} : memref<16x32xf32, #tpu.memory_space<vmem>>, vector<2x32xf32>,
    %131 = vector.extract_strided_slice %8 {offsets = [0, 6, 0], sizes = [2, 1, 128], strides = [1, 1, 1]} : vector<2x8x128xf32> to vector<2x1x128xf32>
    %132 = vector.shape_cast %131 : vector<2x1x128xf32> to vector<2x128xf32>
    %cst_29 = arith.constant dense<0.000000e+00> : vector<2x128xf32>
    %133 = tpu.matmul %129, %1, %cst_29 {dimension_numbers = #tpu.dot_dimension_numbers<[1], [0], [0], [1], [0, 0, 1, 1], [], []>} : vector<2x32xf32>, vector<32x128xf32>, vector<2x128xf32> -> vector<2x128xf32>
    %134 = arith.addf %132, %133 : vector<2x128xf32>
    %135 = arith.negf %134 : vector<2x128xf32>
    %136 = math.exp %135 : vector<2x128xf32>
    %cst_30 = arith.constant 1.000000e+00 : f32
    %137 = vector.broadcast %cst_30 : f32 to vector<2x128xf32>
    %138 = arith.addf %137, %136 : vector<2x128xf32>
    %139 = arith.divf %137, %138 : vector<2x128xf32>
    %140 = math.tanh %134 : vector<2x128xf32>
    %141 = vector.extract_strided_slice %139 {offsets = [0, 0], sizes = [2, 32], strides = [1, 1]} : vector<2x128xf32> to vector<2x32xf32>
    %142 = vector.extract_strided_slice %139 {offsets = [0, 32], sizes = [2, 32], strides = [1, 1]} : vector<2x128xf32> to vector<2x32xf32>
    %143 = vector.extract_strided_slice %140 {offsets = [0, 64], sizes = [2, 32], strides = [1, 1]} : vector<2x128xf32> to vector<2x32xf32>
    %144 = vector.extract_strided_slice %139 {offsets = [0, 96], sizes = [2, 32], strides = [1, 1]} : vector<2x128xf32> to vector<2x32xf32>
    %145 = arith.mulf %142, %127 : vector<2x32xf32>
    %146 = arith.mulf %141, %143 : vector<2x32xf32>
    %147 = arith.addf %145, %146 : vector<2x32xf32>
    %148 = math.tanh %147 : vector<2x32xf32>
    %149 = arith.mulf %144, %148 : vector<2x32xf32>
    %c12 = arith.constant 12 : index
    %c0_31 = arith.constant 0 : index
    %150 = vector.load %arg10[%c12, %c0_31] : memref<16x32xf32, #tpu.memory_space<vmem>>, vector<2x32xf32>
    tpu.vector_store %arg10[%c12, %c0_31], %149 {strides = array<i32>} : memref<16x32xf32, #tpu.memory_space<vmem>>, vector<2x32xf32>,
    %151 = vector.extract_strided_slice %8 {offsets = [0, 7, 0], sizes = [2, 1, 128], strides = [1, 1, 1]} : vector<2x8x128xf32> to vector<2x1x128xf32>
    %152 = vector.shape_cast %151 : vector<2x1x128xf32> to vector<2x128xf32>
    %cst_32 = arith.constant dense<0.000000e+00> : vector<2x128xf32>
    %153 = tpu.matmul %149, %1, %cst_32 {dimension_numbers = #tpu.dot_dimension_numbers<[1], [0], [0], [1], [0, 0, 1, 1], [], []>} : vector<2x32xf32>, vector<32x128xf32>, vector<2x128xf32> -> vector<2x128xf32>
    %154 = arith.addf %152, %153 : vector<2x128xf32>
    %155 = arith.negf %154 : vector<2x128xf32>
    %156 = math.exp %155 : vector<2x128xf32>
    %cst_33 = arith.constant 1.000000e+00 : f32
    %157 = vector.broadcast %cst_33 : f32 to vector<2x128xf32>
    %158 = arith.addf %157, %156 : vector<2x128xf32>
    %159 = arith.divf %157, %158 : vector<2x128xf32>
    %160 = math.tanh %154 : vector<2x128xf32>
    %161 = vector.extract_strided_slice %159 {offsets = [0, 0], sizes = [2, 32], strides = [1, 1]} : vector<2x128xf32> to vector<2x32xf32>
    %162 = vector.extract_strided_slice %159 {offsets = [0, 32], sizes = [2, 32], strides = [1, 1]} : vector<2x128xf32> to vector<2x32xf32>
    %163 = vector.extract_strided_slice %160 {offsets = [0, 64], sizes = [2, 32], strides = [1, 1]} : vector<2x128xf32> to vector<2x32xf32>
    %164 = vector.extract_strided_slice %159 {offsets = [0, 96], sizes = [2, 32], strides = [1, 1]} : vector<2x128xf32> to vector<2x32xf32>
    %165 = arith.mulf %162, %147 : vector<2x32xf32>
    %166 = arith.mulf %161, %163 : vector<2x32xf32>
    %167 = arith.addf %165, %166 : vector<2x32xf32>
    %168 = math.tanh %167 : vector<2x32xf32>
    %169 = arith.mulf %164, %168 : vector<2x32xf32>
    %c14 = arith.constant 14 : index
    %c0_34 = arith.constant 0 : index
    %170 = vector.load %arg10[%c14, %c0_34] : memref<16x32xf32, #tpu.memory_space<vmem>>, vector<2x32xf32>
    tpu.vector_store %arg10[%c14, %c0_34], %169 {strides = array<i32>} : memref<16x32xf32, #tpu.memory_space<vmem>>, vector<2x32xf32>,
    %c0_35 = arith.constant 0 : index
    %c0_36 = arith.constant 0 : index
    %171 = vector.load %arg4[%c0_35, %c0_36] : memref<32x128xf32, #tpu.memory_space<vmem>>, vector<32x128xf32>
    %c0_37 = arith.constant 0 : index
    %c0_38 = arith.constant 0 : index
    %172 = vector.load %arg5[%c0_37, %c0_38] : memref<32x128xf32, #tpu.memory_space<vmem>>, vector<32x128xf32>
    %c0_39 = arith.constant 0 : index
    %c0_40 = arith.constant 0 : index
    %173 = vector.load %arg6[%c0_39, %c0_40] : memref<1x128xf32, #tpu.memory_space<vmem>>, vector<1x128xf32>
    %c0_41 = arith.constant 0 : index
    %c0_42 = arith.constant 0 : index
    %174 = vector.load %arg10[%c0_41, %c0_42] : memref<16x32xf32, #tpu.memory_space<vmem>>, vector<16x32xf32>
    %cst_43 = arith.constant dense<0.000000e+00> : vector<16x128xf32>
    %175 = tpu.matmul %174, %171, %cst_43 {dimension_numbers = #tpu.dot_dimension_numbers<[1], [0], [0], [1], [0, 0, 1, 1], [], []>} : vector<16x32xf32>, vector<32x128xf32>, vector<16x128xf32> -> vector<16x128xf32>
    %176 = vector.broadcast %173 : vector<1x128xf32> to vector<16x128xf32>
    %177 = arith.addf %175, %176 : vector<16x128xf32>
    %cst_44 = arith.constant 0.000000e+00 : f32
    %178 = vector.broadcast %cst_44 : f32 to vector<2x32xf32>
    %cst_45 = arith.constant 0.000000e+00 : f32
    %179 = vector.broadcast %cst_45 : f32 to vector<2x32xf32>
    %180 = vector.extract_strided_slice %177 {offsets = [0, 0], sizes = [2, 128], strides = [1, 1]} : vector<16x128xf32> to vector<2x128xf32>
    %cst_46 = arith.constant dense<0.000000e+00> : vector<2x128xf32>
    %181 = tpu.matmul %178, %172, %cst_46 {dimension_numbers = #tpu.dot_dimension_numbers<[1], [0], [0], [1], [0, 0, 1, 1], [], []>} : vector<2x32xf32>, vector<32x128xf32>, vector<2x128xf32> -> vector<2x128xf32>
    %182 = arith.addf %180, %181 : vector<2x128xf32>
    %183 = arith.negf %182 : vector<2x128xf32>
    %184 = math.exp %183 : vector<2x128xf32>
    %cst_47 = arith.constant 1.000000e+00 : f32
    %185 = vector.broadcast %cst_47 : f32 to vector<2x128xf32>
    %186 = arith.addf %185, %184 : vector<2x128xf32>
    %187 = arith.divf %185, %186 : vector<2x128xf32>
    %188 = math.tanh %182 : vector<2x128xf32>
    %189 = vector.extract_strided_slice %187 {offsets = [0, 0], sizes = [2, 32], strides = [1, 1]} : vector<2x128xf32> to vector<2x32xf32>
    %190 = vector.extract_strided_slice %187 {offsets = [0, 32], sizes = [2, 32], strides = [1, 1]} : vector<2x128xf32> to vector<2x32xf32>
    %191 = vector.extract_strided_slice %188 {offsets = [0, 64], sizes = [2, 32], strides = [1, 1]} : vector<2x128xf32> to vector<2x32xf32>
    %192 = vector.extract_strided_slice %187 {offsets = [0, 96], sizes = [2, 32], strides = [1, 1]} : vector<2x128xf32> to vector<2x32xf32>
    %193 = arith.mulf %190, %179 : vector<2x32xf32>
    %194 = arith.mulf %189, %191 : vector<2x32xf32>
    %195 = arith.addf %193, %194 : vector<2x32xf32>
    %196 = math.tanh %195 : vector<2x32xf32>
    %197 = arith.mulf %192, %196 : vector<2x32xf32>
    %c0_48 = arith.constant 0 : index
    %c0_49 = arith.constant 0 : index
    %198 = vector.load %arg10[%c0_48, %c0_49] : memref<16x32xf32, #tpu.memory_space<vmem>>, vector<2x32xf32>
    tpu.vector_store %arg10[%c0_48, %c0_49], %197 {strides = array<i32>} : memref<16x32xf32, #tpu.memory_space<vmem>>, vector<2x32xf32>,
    %199 = vector.extract_strided_slice %177 {offsets = [2, 0], sizes = [2, 128], strides = [1, 1]} : vector<16x128xf32> to vector<2x128xf32>
    %cst_50 = arith.constant dense<0.000000e+00> : vector<2x128xf32>
    %200 = tpu.matmul %197, %172, %cst_50 {dimension_numbers = #tpu.dot_dimension_numbers<[1], [0], [0], [1], [0, 0, 1, 1], [], []>} : vector<2x32xf32>, vector<32x128xf32>, vector<2x128xf32> -> vector<2x128xf32>
    %201 = arith.addf %199, %200 : vector<2x128xf32>
    %202 = arith.negf %201 : vector<2x128xf32>
    %203 = math.exp %202 : vector<2x128xf32>
    %cst_51 = arith.constant 1.000000e+00 : f32
    %204 = vector.broadcast %cst_51 : f32 to vector<2x128xf32>
    %205 = arith.addf %204, %203 : vector<2x128xf32>
    %206 = arith.divf %204, %205 : vector<2x128xf32>
    %207 = math.tanh %201 : vector<2x128xf32>
    %208 = vector.extract_strided_slice %206 {offsets = [0, 0], sizes = [2, 32], strides = [1, 1]} : vector<2x128xf32> to vector<2x32xf32>
    %209 = vector.extract_strided_slice %206 {offsets = [0, 32], sizes = [2, 32], strides = [1, 1]} : vector<2x128xf32> to vector<2x32xf32>
    %210 = vector.extract_strided_slice %207 {offsets = [0, 64], sizes = [2, 32], strides = [1, 1]} : vector<2x128xf32> to vector<2x32xf32>
    %211 = vector.extract_strided_slice %206 {offsets = [0, 96], sizes = [2, 32], strides = [1, 1]} : vector<2x128xf32> to vector<2x32xf32>
    %212 = arith.mulf %209, %195 : vector<2x32xf32>
    %213 = arith.mulf %208, %210 : vector<2x32xf32>
    %214 = arith.addf %212, %213 : vector<2x32xf32>
    %215 = math.tanh %214 : vector<2x32xf32>
    %216 = arith.mulf %211, %215 : vector<2x32xf32>
    %c2_52 = arith.constant 2 : index
    %c0_53 = arith.constant 0 : index
    %217 = vector.load %arg10[%c2_52, %c0_53] : memref<16x32xf32, #tpu.memory_space<vmem>>, vector<2x32xf32>
    tpu.vector_store %arg10[%c2_52, %c0_53], %216 {strides = array<i32>} : memref<16x32xf32, #tpu.memory_space<vmem>>, vector<2x32xf32>,
    %218 = vector.extract_strided_slice %177 {offsets = [4, 0], sizes = [2, 128], strides = [1, 1]} : vector<16x128xf32> to vector<2x128xf32>
    %cst_54 = arith.constant dense<0.000000e+00> : vector<2x128xf32>
    %219 = tpu.matmul %216, %172, %cst_54 {dimension_numbers = #tpu.dot_dimension_numbers<[1], [0], [0], [1], [0, 0, 1, 1], [], []>} : vector<2x32xf32>, vector<32x128xf32>, vector<2x128xf32> -> vector<2x128xf32>
    %220 = arith.addf %218, %219 : vector<2x128xf32>
    %221 = arith.negf %220 : vector<2x128xf32>
    %222 = math.exp %221 : vector<2x128xf32>
    %cst_55 = arith.constant 1.000000e+00 : f32
    %223 = vector.broadcast %cst_55 : f32 to vector<2x128xf32>
    %224 = arith.addf %223, %222 : vector<2x128xf32>
    %225 = arith.divf %223, %224 : vector<2x128xf32>
    %226 = math.tanh %220 : vector<2x128xf32>
    %227 = vector.extract_strided_slice %225 {offsets = [0, 0], sizes = [2, 32], strides = [1, 1]} : vector<2x128xf32> to vector<2x32xf32>
    %228 = vector.extract_strided_slice %225 {offsets = [0, 32], sizes = [2, 32], strides = [1, 1]} : vector<2x128xf32> to vector<2x32xf32>
    %229 = vector.extract_strided_slice %226 {offsets = [0, 64], sizes = [2, 32], strides = [1, 1]} : vector<2x128xf32> to vector<2x32xf32>
    %230 = vector.extract_strided_slice %225 {offsets = [0, 96], sizes = [2, 32], strides = [1, 1]} : vector<2x128xf32> to vector<2x32xf32>
    %231 = arith.mulf %228, %214 : vector<2x32xf32>
    %232 = arith.mulf %227, %229 : vector<2x32xf32>
    %233 = arith.addf %231, %232 : vector<2x32xf32>
    %234 = math.tanh %233 : vector<2x32xf32>
    %235 = arith.mulf %230, %234 : vector<2x32xf32>
    %c4_56 = arith.constant 4 : index
    %c0_57 = arith.constant 0 : index
    %236 = vector.load %arg10[%c4_56, %c0_57] : memref<16x32xf32, #tpu.memory_space<vmem>>, vector<2x32xf32>
    tpu.vector_store %arg10[%c4_56, %c0_57], %235 {strides = array<i32>} : memref<16x32xf32, #tpu.memory_space<vmem>>, vector<2x32xf32>,
    %237 = vector.extract_strided_slice %177 {offsets = [6, 0], sizes = [2, 128], strides = [1, 1]} : vector<16x128xf32> to vector<2x128xf32>
    %cst_58 = arith.constant dense<0.000000e+00> : vector<2x128xf32>
    %238 = tpu.matmul %235, %172, %cst_58 {dimension_numbers = #tpu.dot_dimension_numbers<[1], [0], [0], [1], [0, 0, 1, 1], [], []>} : vector<2x32xf32>, vector<32x128xf32>, vector<2x128xf32> -> vector<2x128xf32>
    %239 = arith.addf %237, %238 : vector<2x128xf32>
    %240 = arith.negf %239 : vector<2x128xf32>
    %241 = math.exp %240 : vector<2x128xf32>
    %cst_59 = arith.constant 1.000000e+00 : f32
    %242 = vector.broadcast %cst_59 : f32 to vector<2x128xf32>
    %243 = arith.addf %242, %241 : vector<2x128xf32>
    %244 = arith.divf %242, %243 : vector<2x128xf32>
    %245 = math.tanh %239 : vector<2x128xf32>
    %246 = vector.extract_strided_slice %244 {offsets = [0, 0], sizes = [2, 32], strides = [1, 1]} : vector<2x128xf32> to vector<2x32xf32>
    %247 = vector.extract_strided_slice %244 {offsets = [0, 32], sizes = [2, 32], strides = [1, 1]} : vector<2x128xf32> to vector<2x32xf32>
    %248 = vector.extract_strided_slice %245 {offsets = [0, 64], sizes = [2, 32], strides = [1, 1]} : vector<2x128xf32> to vector<2x32xf32>
    %249 = vector.extract_strided_slice %244 {offsets = [0, 96], sizes = [2, 32], strides = [1, 1]} : vector<2x128xf32> to vector<2x32xf32>
    %250 = arith.mulf %247, %233 : vector<2x32xf32>
    %251 = arith.mulf %246, %248 : vector<2x32xf32>
    %252 = arith.addf %250, %251 : vector<2x32xf32>
    %253 = math.tanh %252 : vector<2x32xf32>
    %254 = arith.mulf %249, %253 : vector<2x32xf32>
    %c6_60 = arith.constant 6 : index
    %c0_61 = arith.constant 0 : index
    %255 = vector.load %arg10[%c6_60, %c0_61] : memref<16x32xf32, #tpu.memory_space<vmem>>, vector<2x32xf32>
    tpu.vector_store %arg10[%c6_60, %c0_61], %254 {strides = array<i32>} : memref<16x32xf32, #tpu.memory_space<vmem>>, vector<2x32xf32>,
    %256 = vector.extract_strided_slice %177 {offsets = [8, 0], sizes = [2, 128], strides = [1, 1]} : vector<16x128xf32> to vector<2x128xf32>
    %cst_62 = arith.constant dense<0.000000e+00> : vector<2x128xf32>
    %257 = tpu.matmul %254, %172, %cst_62 {dimension_numbers = #tpu.dot_dimension_numbers<[1], [0], [0], [1], [0, 0, 1, 1], [], []>} : vector<2x32xf32>, vector<32x128xf32>, vector<2x128xf32> -> vector<2x128xf32>
    %258 = arith.addf %256, %257 : vector<2x128xf32>
    %259 = arith.negf %258 : vector<2x128xf32>
    %260 = math.exp %259 : vector<2x128xf32>
    %cst_63 = arith.constant 1.000000e+00 : f32
    %261 = vector.broadcast %cst_63 : f32 to vector<2x128xf32>
    %262 = arith.addf %261, %260 : vector<2x128xf32>
    %263 = arith.divf %261, %262 : vector<2x128xf32>
    %264 = math.tanh %258 : vector<2x128xf32>
    %265 = vector.extract_strided_slice %263 {offsets = [0, 0], sizes = [2, 32], strides = [1, 1]} : vector<2x128xf32> to vector<2x32xf32>
    %266 = vector.extract_strided_slice %263 {offsets = [0, 32], sizes = [2, 32], strides = [1, 1]} : vector<2x128xf32> to vector<2x32xf32>
    %267 = vector.extract_strided_slice %264 {offsets = [0, 64], sizes = [2, 32], strides = [1, 1]} : vector<2x128xf32> to vector<2x32xf32>
    %268 = vector.extract_strided_slice %263 {offsets = [0, 96], sizes = [2, 32], strides = [1, 1]} : vector<2x128xf32> to vector<2x32xf32>
    %269 = arith.mulf %266, %252 : vector<2x32xf32>
    %270 = arith.mulf %265, %267 : vector<2x32xf32>
    %271 = arith.addf %269, %270 : vector<2x32xf32>
    %272 = math.tanh %271 : vector<2x32xf32>
    %273 = arith.mulf %268, %272 : vector<2x32xf32>
    %c8_64 = arith.constant 8 : index
    %c0_65 = arith.constant 0 : index
    %274 = vector.load %arg10[%c8_64, %c0_65] : memref<16x32xf32, #tpu.memory_space<vmem>>, vector<2x32xf32>
    tpu.vector_store %arg10[%c8_64, %c0_65], %273 {strides = array<i32>} : memref<16x32xf32, #tpu.memory_space<vmem>>, vector<2x32xf32>,
    %275 = vector.extract_strided_slice %177 {offsets = [10, 0], sizes = [2, 128], strides = [1, 1]} : vector<16x128xf32> to vector<2x128xf32>
    %cst_66 = arith.constant dense<0.000000e+00> : vector<2x128xf32>
    %276 = tpu.matmul %273, %172, %cst_66 {dimension_numbers = #tpu.dot_dimension_numbers<[1], [0], [0], [1], [0, 0, 1, 1], [], []>} : vector<2x32xf32>, vector<32x128xf32>, vector<2x128xf32> -> vector<2x128xf32>
    %277 = arith.addf %275, %276 : vector<2x128xf32>
    %278 = arith.negf %277 : vector<2x128xf32>
    %279 = math.exp %278 : vector<2x128xf32>
    %cst_67 = arith.constant 1.000000e+00 : f32
    %280 = vector.broadcast %cst_67 : f32 to vector<2x128xf32>
    %281 = arith.addf %280, %279 : vector<2x128xf32>
    %282 = arith.divf %280, %281 : vector<2x128xf32>
    %283 = math.tanh %277 : vector<2x128xf32>
    %284 = vector.extract_strided_slice %282 {offsets = [0, 0], sizes = [2, 32], strides = [1, 1]} : vector<2x128xf32> to vector<2x32xf32>
    %285 = vector.extract_strided_slice %282 {offsets = [0, 32], sizes = [2, 32], strides = [1, 1]} : vector<2x128xf32> to vector<2x32xf32>
    %286 = vector.extract_strided_slice %283 {offsets = [0, 64], sizes = [2, 32], strides = [1, 1]} : vector<2x128xf32> to vector<2x32xf32>
    %287 = vector.extract_strided_slice %282 {offsets = [0, 96], sizes = [2, 32], strides = [1, 1]} : vector<2x128xf32> to vector<2x32xf32>
    %288 = arith.mulf %285, %271 : vector<2x32xf32>
    %289 = arith.mulf %284, %286 : vector<2x32xf32>
    %290 = arith.addf %288, %289 : vector<2x32xf32>
    %291 = math.tanh %290 : vector<2x32xf32>
    %292 = arith.mulf %287, %291 : vector<2x32xf32>
    %c10_68 = arith.constant 10 : index
    %c0_69 = arith.constant 0 : index
    %293 = vector.load %arg10[%c10_68, %c0_69] : memref<16x32xf32, #tpu.memory_space<vmem>>, vector<2x32xf32>
    tpu.vector_store %arg10[%c10_68, %c0_69], %292 {strides = array<i32>} : memref<16x32xf32, #tpu.memory_space<vmem>>, vector<2x32xf32>,
    %294 = vector.extract_strided_slice %177 {offsets = [12, 0], sizes = [2, 128], strides = [1, 1]} : vector<16x128xf32> to vector<2x128xf32>
    %cst_70 = arith.constant dense<0.000000e+00> : vector<2x128xf32>
    %295 = tpu.matmul %292, %172, %cst_70 {dimension_numbers = #tpu.dot_dimension_numbers<[1], [0], [0], [1], [0, 0, 1, 1], [], []>} : vector<2x32xf32>, vector<32x128xf32>, vector<2x128xf32> -> vector<2x128xf32>
    %296 = arith.addf %294, %295 : vector<2x128xf32>
    %297 = arith.negf %296 : vector<2x128xf32>
    %298 = math.exp %297 : vector<2x128xf32>
    %cst_71 = arith.constant 1.000000e+00 : f32
    %299 = vector.broadcast %cst_71 : f32 to vector<2x128xf32>
    %300 = arith.addf %299, %298 : vector<2x128xf32>
    %301 = arith.divf %299, %300 : vector<2x128xf32>
    %302 = math.tanh %296 : vector<2x128xf32>
    %303 = vector.extract_strided_slice %301 {offsets = [0, 0], sizes = [2, 32], strides = [1, 1]} : vector<2x128xf32> to vector<2x32xf32>
    %304 = vector.extract_strided_slice %301 {offsets = [0, 32], sizes = [2, 32], strides = [1, 1]} : vector<2x128xf32> to vector<2x32xf32>
    %305 = vector.extract_strided_slice %302 {offsets = [0, 64], sizes = [2, 32], strides = [1, 1]} : vector<2x128xf32> to vector<2x32xf32>
    %306 = vector.extract_strided_slice %301 {offsets = [0, 96], sizes = [2, 32], strides = [1, 1]} : vector<2x128xf32> to vector<2x32xf32>
    %307 = arith.mulf %304, %290 : vector<2x32xf32>
    %308 = arith.mulf %303, %305 : vector<2x32xf32>
    %309 = arith.addf %307, %308 : vector<2x32xf32>
    %310 = math.tanh %309 : vector<2x32xf32>
    %311 = arith.mulf %306, %310 : vector<2x32xf32>
    %c12_72 = arith.constant 12 : index
    %c0_73 = arith.constant 0 : index
    %312 = vector.load %arg10[%c12_72, %c0_73] : memref<16x32xf32, #tpu.memory_space<vmem>>, vector<2x32xf32>
    tpu.vector_store %arg10[%c12_72, %c0_73], %311 {strides = array<i32>} : memref<16x32xf32, #tpu.memory_space<vmem>>, vector<2x32xf32>,
    %313 = vector.extract_strided_slice %177 {offsets = [14, 0], sizes = [2, 128], strides = [1, 1]} : vector<16x128xf32> to vector<2x128xf32>
    %cst_74 = arith.constant dense<0.000000e+00> : vector<2x128xf32>
    %314 = tpu.matmul %311, %172, %cst_74 {dimension_numbers = #tpu.dot_dimension_numbers<[1], [0], [0], [1], [0, 0, 1, 1], [], []>} : vector<2x32xf32>, vector<32x128xf32>, vector<2x128xf32> -> vector<2x128xf32>
    %315 = arith.addf %313, %314 : vector<2x128xf32>
    %316 = arith.negf %315 : vector<2x128xf32>
    %317 = math.exp %316 : vector<2x128xf32>
    %cst_75 = arith.constant 1.000000e+00 : f32
    %318 = vector.broadcast %cst_75 : f32 to vector<2x128xf32>
    %319 = arith.addf %318, %317 : vector<2x128xf32>
    %320 = arith.divf %318, %319 : vector<2x128xf32>
    %321 = math.tanh %315 : vector<2x128xf32>
    %322 = vector.extract_strided_slice %320 {offsets = [0, 0], sizes = [2, 32], strides = [1, 1]} : vector<2x128xf32> to vector<2x32xf32>
    %323 = vector.extract_strided_slice %320 {offsets = [0, 32], sizes = [2, 32], strides = [1, 1]} : vector<2x128xf32> to vector<2x32xf32>
    %324 = vector.extract_strided_slice %321 {offsets = [0, 64], sizes = [2, 32], strides = [1, 1]} : vector<2x128xf32> to vector<2x32xf32>
    %325 = vector.extract_strided_slice %320 {offsets = [0, 96], sizes = [2, 32], strides = [1, 1]} : vector<2x128xf32> to vector<2x32xf32>
    %326 = arith.mulf %323, %309 : vector<2x32xf32>
    %327 = arith.mulf %322, %324 : vector<2x32xf32>
    %328 = arith.addf %326, %327 : vector<2x32xf32>
    %329 = math.tanh %328 : vector<2x32xf32>
    %330 = arith.mulf %325, %329 : vector<2x32xf32>
    %c14_76 = arith.constant 14 : index
    %c0_77 = arith.constant 0 : index
    %331 = vector.load %arg10[%c14_76, %c0_77] : memref<16x32xf32, #tpu.memory_space<vmem>>, vector<2x32xf32>
    tpu.vector_store %arg10[%c14_76, %c0_77], %330 {strides = array<i32>} : memref<16x32xf32, #tpu.memory_space<vmem>>, vector<2x32xf32>,
    %c14_78 = arith.constant 14 : index
    %c0_79 = arith.constant 0 : index
    %332 = vector.load %arg10[%c14_78, %c0_79] : memref<16x32xf32, #tpu.memory_space<vmem>>, vector<2x32xf32>
    %c0_80 = arith.constant 0 : index
    %c0_81 = arith.constant 0 : index
    %333 = vector.load %arg7[%c0_80, %c0_81] : memref<32x1xf32, #tpu.memory_space<vmem>>, vector<32x1xf32>
    %cst_82 = arith.constant dense<0.000000e+00> : vector<2x1xf32>
    %334 = tpu.matmul %332, %333, %cst_82 {dimension_numbers = #tpu.dot_dimension_numbers<[1], [0], [0], [1], [0, 0, 1, 1], [], []>} : vector<2x32xf32>, vector<32x1xf32>, vector<2x1xf32> -> vector<2x1xf32>
    %c0_83 = arith.constant 0 : index
    %c0_84 = arith.constant 0 : index
    %335 = vector.load %arg8[%c0_83, %c0_84] : memref<1x1xf32, #tpu.memory_space<vmem>>, vector<1x1xf32>
    %336 = vector.broadcast %335 : vector<1x1xf32> to vector<2x1xf32>
    %337 = arith.addf %334, %336 : vector<2x1xf32>
    %338 = vector.shape_cast %337 : vector<2x1xf32> to vector<2x1x1xf32>
    %c0_85 = arith.constant 0 : index
    %c0_86 = arith.constant 0 : index
    %c0_87 = arith.constant 0 : index
    %339 = vector.load %arg9[%c0_85, %c0_86, %c0_87] : memref<2x1x1xf32, #tpu.memory_space<vmem>>, vector<2x1x1xf32>
    tpu.vector_store %arg9[%c0_85, %c0_86, %c0_87], %338 {strides = array<i32>} : memref<2x1x1xf32, #tpu.memory_space<vmem>>, vector<2x1x1xf32>,
    return
  }
}

</mosaic_0001>

<llo_original>
// kernel: tpu_custom_call.1
$region0: #{tpu_custom_call.1}
  #allocation0 [shape = 'u32[]', space=smem, size = 0x4, offset = 0x4, fixed_abs, tag = 'smem constant byte address 0x4 - core index']
  #allocation1 [shape = 'u32[144,128]{1,0:T(1,128)}', space=vmem, size = 0x12000, scoped, tag = 'internal scratch']
  #allocation2 [shape = 'f32[16,32]{1,0:T(8,128)}', space=vmem, size = 0x2000, scoped, tag = 'scratch operand']
  #allocation3 [shape = 'f32[1,1]{1,0:T(1,128)S(1)}', space=vmem, size = 0x200, scoped, tag = 'scoped memory for tpu_custom_call.1']
  %s0 = inlined_call_operand.vmem [shape: f32[2,8,4], index: 0, kind: input, shape index: {}]
  %s1 = inlined_call_operand.hbm [shape: f32[4,128], index: 1, kind: input, shape index: {}]
  %s2 = inlined_call_operand.vmem [shape: f32[32,128], index: 2, kind: input, shape index: {}]
  %s3 = inlined_call_operand.vmem [shape: f32[1,128], index: 3, kind: input, shape index: {}]
  %s4 = inlined_call_operand.vmem [shape: f32[32,128], index: 4, kind: input, shape index: {}]
  %s5 = inlined_call_operand.hbm [shape: f32[32,128], index: 5, kind: input, shape index: {}]
  %s6 = inlined_call_operand.vmem [shape: f32[1,128], index: 6, kind: input, shape index: {}]
  %s7 = inlined_call_operand.vmem [shape: f32[32,1], index: 7, kind: input, shape index: {}]
  %s8 = inlined_call_operand.<no memory space> [shape: f32[1,1], index: 8, kind: input, shape index: {}]
  %s9 = inlined_call_operand.vmem [shape: f32[2,1,1], index: 9, kind: output, shape index: {}]
  %s10 = sld [smem:[#allocation0]]
  $region54: #{tpu_custom_call.1} parent=0
    _
  %s12 = ssub.s32 1, %s10
  %s13 = scalar_select 0, %s12, %s10
  %v14 = vstv %s8
  %15 = vst [vmem:[#allocation3] sm:$0x1] %v14
  $region1: #{tpu_custom_call.1} parent=0
    #allocation4 [shape = 'u8[2048]{0}', space=vmem, size = 0x800, scoped, tag = 'input window, operand 1, single buffered']
    #allocation5 [shape = 's32[1]{0}', space=sflag, size = 0x4, scoped, tag = 'scoped memory for tpu_custom_call.1']
    #allocation6 [shape = 'u8[16384]{0}', space=vmem, size = 0x4000, scoped, tag = 'input window, operand 5, single buffered']
    #allocation7 [shape = 's32[1]{0}', space=sflag, size = 0x4, scoped, tag = 'scoped memory for tpu_custom_call.1']
    %16 = vsyncpa [#allocation5], 0
    %17 = vsyncpa [#allocation7], 0
    // Predicated region
    $region2: #{tpu_custom_call.1} parent=1 // pred_check
      _
    $region3: #{tpu_custom_call.1} parent=1 // pred_check_branch
      %19 = sbr.rel (0) target = $region5
    $region4: #{tpu_custom_call.1} parent=1 // pred_region
      _
    $region5: #{tpu_custom_call.1} parent=1 // pred_fallthru
      _
    // Predicated region
    $region6: #{tpu_custom_call.1} parent=1 // pred_check
      _
    $region7: #{tpu_custom_call.1} parent=1 // pred_check_branch
      %21 = sbr.rel (0) target = $region9
    $region8: #{tpu_custom_call.1} parent=1 // pred_region
      %s23 = ssub.s32 64, 64
      %24 = vsyncadd [#allocation5], %s23
      %s26 = sshll.u32 [#allocation4], 4
      %s27 = int_to_ptr.vmem [resolvable:$true] %s26
      %29 = dma.hbm_to_vmem [thread:$0]  %s1, 64, %s27, [#allocation5]
    $region9: #{tpu_custom_call.1} parent=1 // pred_fallthru
      _
    // Predicated region
    $region10: #{tpu_custom_call.1} parent=1 // pred_check
      _
    $region11: #{tpu_custom_call.1} parent=1 // pred_check_branch
      %31 = sbr.rel (0) target = $region13
    $region12: #{tpu_custom_call.1} parent=1 // pred_region
      _
    $region13: #{tpu_custom_call.1} parent=1 // pred_fallthru
      _
    // Predicated region
    $region14: #{tpu_custom_call.1} parent=1 // pred_check
      _
    $region15: #{tpu_custom_call.1} parent=1 // pred_check_branch
      %33 = sbr.rel (0) target = $region17
    $region16: #{tpu_custom_call.1} parent=1 // pred_region
      _
    $region17: #{tpu_custom_call.1} parent=1 // pred_fallthru
      _
    // Predicated region
    $region18: #{tpu_custom_call.1} parent=1 // pred_check
      _
    $region19: #{tpu_custom_call.1} parent=1 // pred_check_branch
      %35 = sbr.rel (0) target = $region21
    $region20: #{tpu_custom_call.1} parent=1 // pred_region
      _
    $region21: #{tpu_custom_call.1} parent=1 // pred_fallthru
      _
    // Predicated region
    $region22: #{tpu_custom_call.1} parent=1 // pred_check
      _
    $region23: #{tpu_custom_call.1} parent=1 // pred_check_branch
      %37 = sbr.rel (0) target = $region25
    $region24: #{tpu_custom_call.1} parent=1 // pred_region
      %s39 = ssub.s32 512, 512
      %40 = vsyncadd [#allocation7], %s39
      %s41 = sshll.u32 [#allocation6], 4
      %s42 = int_to_ptr.vmem [resolvable:$true] %s41
      %47 = dma.hbm_to_vmem [thread:$0]  %s5, 512, %s42, [#allocation7], 128, 128, 8
    $region25: #{tpu_custom_call.1} parent=1 // pred_fallthru
      _
    // Predicated region
    $region26: #{tpu_custom_call.1} parent=1 // pred_check
      _
    $region27: #{tpu_custom_call.1} parent=1 // pred_check_branch
      %49 = sbr.rel (0) target = $region29
    $region28: #{tpu_custom_call.1} parent=1 // pred_region
      _
    $region29: #{tpu_custom_call.1} parent=1 // pred_fallthru
      _
    // Predicated region
    $region30: #{tpu_custom_call.1} parent=1 // pred_check
      _
    $region31: #{tpu_custom_call.1} parent=1 // pred_check_branch
      %51 = sbr.rel (0) target = $region33
    $region32: #{tpu_custom_call.1} parent=1 // pred_region
      _
    $region33: #{tpu_custom_call.1} parent=1 // pred_fallthru
      _
    // Predicated region
    $region34: #{tpu_custom_call.1} parent=1 // pred_check
      _
    $region35: #{tpu_custom_call.1} parent=1 // pred_check_branch
      %53 = sbr.rel (0) target = $region37
    $region36: #{tpu_custom_call.1} parent=1 // pred_region
      _
    $region37: #{tpu_custom_call.1} parent=1 // pred_fallthru
      _
    // Predicated region
    $region38: #{tpu_custom_call.1} parent=1 // pred_check
      _
    $region39: #{tpu_custom_call.1} parent=1 // pred_check_branch
      %55 = sbr.rel (0) target = $region41
    $region40: #{tpu_custom_call.1} parent=1 // pred_region
      %56 = dma.done [#allocation5], 64
    $region41: #{tpu_custom_call.1} parent=1 // pred_fallthru
      _
    // Predicated region
    $region42: #{tpu_custom_call.1} parent=1 // pred_check
      _
    $region43: #{tpu_custom_call.1} parent=1 // pred_check_branch
      %58 = sbr.rel (0) target = $region45
    $region44: #{tpu_custom_call.1} parent=1 // pred_region
      %59 = dma.done [#allocation7], 512
    $region45: #{tpu_custom_call.1} parent=1 // pred_fallthru
      _
    %v60 = vld [vmem:[#allocation4] sm:$0xf]
    %v61 = vld [vmem:[%s2] sm:$0xff]
    %v62 = vld [vmem:[%s2 + $0x8] sm:$0xff]
    %v63 = vld [vmem:[%s2 + $0x10] sm:$0xff]
    %v64 = vld [vmem:[%s2 + $0x18] sm:$0xff]
    %v65 = vld [vmem:[%s3] sm:$0x1]
    %v66 = vld [vmem:[%s0] sm:$0xff]
    %v67 = vld [vmem:[%s0 + $0x8] sm:$0xff]
    %v69 = vlaneseq
    %v70 = vshrl.u32 %v69, 7
    %v71 = vsub.s32 0, %v70
    %v72 = vrot.slane %v65, %v71
    %vm74 = vcmask 31744
    %v76 = vsel %vm74, %v66, 0
    %v79 = vsel %vm74, %v67, 0
    %vm81 = vcmask 1043456
    %v83 = vsel %vm81, %v60, 0
    %85 = vmatprep.subr.mxu0 0.0
    %86 = vmatpush1.msra.mxu0 %v83
    %87 = vmatprep.subr.mxu0 0.0
    %88 = vmatpush1.msra.mxu0 0.0
    %89 = vmatprep.subr.mxu0 0.0
    %90 = vmatpush1.msra.mxu0 0.0
    %91 = vmatprep.subr.mxu0 0.0
    %92 = vmatpush1.msra.mxu0 0.0
    %93 = vmatprep.subr.mxu0 0.0
    %94 = vmatpush1.msra.mxu0 0.0
    %95 = vmatprep.subr.mxu0 0.0
    %96 = vmatpush1.msra.mxu0 0.0
    %97 = vmatprep.subr.mxu0 0.0
    %98 = vmatpush1.msra.mxu0 0.0
    %99 = vmatprep.subr.mxu0 0.0
    %100 = vmatpush1.msra.mxu0 0.0
    %101 = vmatprep.subr.mxu0 0.0
    %102 = vmatpush1.msra.mxu0 0.0
    %103 = vmatprep.subr.mxu0 0.0
    %104 = vmatpush1.msra.mxu0 0.0
    %105 = vmatprep.subr.mxu0 0.0
    %106 = vmatpush1.msra.mxu0 0.0
    %107 = vmatprep.subr.mxu0 0.0
    %108 = vmatpush1.msra.mxu0 0.0
    %109 = vmatprep.subr.mxu0 0.0
    %110 = vmatpush1.msra.mxu0 0.0
    %111 = vmatprep.subr.mxu0 0.0
    %112 = vmatpush1.msra.mxu0 0.0
    %113 = vmatprep.subr.mxu0 0.0
    %114 = vmatpush1.msra.mxu0 0.0
    %115 = vmatprep.subr.mxu0 0.0
    %116 = vmatpush1.msra.mxu0 0.0
    %117 = vmatprep.subr.mxu0 0.0
    %118 = vmatpush1.msra.mxu0 0.0
    %119 = vmatprep.subr.mxu0 0.0
    %120 = vmatpush1.msra.mxu0 0.0
    %121 = vmatprep.subr.mxu0 0.0
    %122 = vmatpush1.msra.mxu0 0.0
    %123 = vmatprep.subr.mxu0 0.0
    %124 = vmatpush1.msra.mxu0 0.0
    %125 = vmatprep.subr.mxu0 0.0
    %126 = vmatpush1.msra.mxu0 0.0
    %127 = vmatprep.subr.mxu0 0.0
    %128 = vmatpush1.msra.mxu0 0.0
    %129 = vmatprep.subr.mxu0 0.0
    %130 = vmatpush1.msra.mxu0 0.0
    %131 = vmatprep.subr.mxu0 0.0
    %132 = vmatpush1.msra.mxu0 0.0
    %133 = vmatprep.subr.mxu0 0.0
    %134 = vmatpush1.msra.mxu0 0.0
    %135 = vmatprep.subr.mxu0 0.0
    %136 = vmatpush1.msra.mxu0 0.0
    %137 = vmatprep.subr.mxu0 0.0
    %138 = vmatpush1.msra.mxu0 0.0
    %139 = vmatprep.subr.mxu0 0.0
    %140 = vmatpush1.msra.mxu0 0.0
    %141 = vmatprep.subr.mxu0 0.0
    %142 = vmatpush1.msra.mxu0 0.0
    %143 = vmatprep.subr.mxu0 0.0
    %144 = vmatpush1.msra.mxu0 0.0
    %145 = vmatprep.subr.mxu0 0.0
    %146 = vmatpush1.msra.mxu0 0.0
    %147 = vmatprep.subr.mxu0 0.0
    %148 = vmatpush1.msra.mxu0 0.0
    %149 = vmatprep.mubr.f32.mxu0 0.0
    %150 = vmatmul.mubr.f32.gmra.mrb[0].mxu0 %v76
    %v151 = vpop.f32.mrb[0].mxu0
    %v152 = vadd.f32 %v72, %v151
    %v153 = vpop.f32.mrb[0].mxu0
    %154 = vmatprep.mubr.f32.mxu0 0.0
    %155 = vmatmul.mubr.f32.gmra.mrb[0].mxu0 %v79
    %v156 = vpop.f32.mrb[0].mxu0
    %v157 = vadd.f32 %v72, %v156
    %v158 = vpop.f32.mrb[0].mxu0
    %159 = vdwg.mxu0
    %vm160 = vcmask 261120
    %v162 = vsel %vm160, 0.0, 0
    %164 = vmatprep.subr.mxu0 0.0
    %165 = vmatpush1.msra.mxu0 %v61
    %166 = vmatprep.subr.mxu0 0.0
    %167 = vmatpush1.msra.mxu0 %v62
    %168 = vmatprep.subr.mxu0 0.0
    %169 = vmatpush1.msra.mxu0 %v63
    %170 = vmatprep.subr.mxu0 0.0
    %171 = vmatpush1.msra.mxu0 %v64
    %172 = vmatprep.subr.mxu0 0.0
    %173 = vmatpush1.msra.mxu0 0.0
    %174 = vmatprep.subr.mxu0 0.0
    %175 = vmatpush1.msra.mxu0 0.0
    %176 = vmatprep.subr.mxu0 0.0
    %177 = vmatpush1.msra.mxu0 0.0
    %178 = vmatprep.subr.mxu0 0.0
    %179 = vmatpush1.msra.mxu0 0.0
    %180 = vmatprep.subr.mxu0 0.0
    %181 = vmatpush1.msra.mxu0 0.0
    %182 = vmatprep.subr.mxu0 0.0
    %183 = vmatpush1.msra.mxu0 0.0
    %184 = vmatprep.subr.mxu0 0.0
    %185 = vmatpush1.msra.mxu0 0.0
    %186 = vmatprep.subr.mxu0 0.0
    %187 = vmatpush1.msra.mxu0 0.0
    %188 = vmatprep.subr.mxu0 0.0
    %189 = vmatpush1.msra.mxu0 0.0
    %190 = vmatprep.subr.mxu0 0.0
    %191 = vmatpush1.msra.mxu0 0.0
    %192 = vmatprep.subr.mxu0 0.0
    %193 = vmatpush1.msra.mxu0 0.0
    %194 = vmatprep.subr.mxu0 0.0
    %195 = vmatpush1.msra.mxu0 0.0
    %196 = vmatprep.subr.mxu0 0.0
    %197 = vmatpush1.msra.mxu0 0.0
    %198 = vmatprep.subr.mxu0 0.0
    %199 = vmatpush1.msra.mxu0 0.0
    %200 = vmatprep.subr.mxu0 0.0
    %201 = vmatpush1.msra.mxu0 0.0
    %202 = vmatprep.subr.mxu0 0.0
    %203 = vmatpush1.msra.mxu0 0.0
    %204 = vmatprep.subr.mxu0 0.0
    %205 = vmatpush1.msra.mxu0 0.0
    %206 = vmatprep.subr.mxu0 0.0
    %207 = vmatpush1.msra.mxu0 0.0
    %208 = vmatprep.subr.mxu0 0.0
    %209 = vmatpush1.msra.mxu0 0.0
    %210 = vmatprep.subr.mxu0 0.0
    %211 = vmatpush1.msra.mxu0 0.0
    %212 = vmatprep.subr.mxu0 0.0
    %213 = vmatpush1.msra.mxu0 0.0
    %214 = vmatprep.subr.mxu0 0.0
    %215 = vmatpush1.msra.mxu0 0.0
    %216 = vmatprep.subr.mxu0 0.0
    %217 = vmatpush1.msra.mxu0 0.0
    %218 = vmatprep.subr.mxu0 0.0
    %219 = vmatpush1.msra.mxu0 0.0
    %220 = vmatprep.subr.mxu0 0.0
    %221 = vmatpush1.msra.mxu0 0.0
    %222 = vmatprep.subr.mxu0 0.0
    %223 = vmatpush1.msra.mxu0 0.0
    %224 = vmatprep.subr.mxu0 0.0
    %225 = vmatpush1.msra.mxu0 0.0
    %226 = vmatprep.subr.mxu0 0.0
    %227 = vmatpush1.msra.mxu0 0.0
    %228 = vmatprep.mubr.f32.mxu0 0.0
    %229 = vmatmul.mubr.f32.gmra.mrb[0].mxu0 %v162
    %v230 = vpop.f32.mrb[0].mxu0
    %v231 = vadd.f32 0.0, %v230
    %v232 = vpop.f32.mrb[0].mxu0
    %233 = vdwg.mxu0
    %v235 = vrot.slane %v231, 1
    %v238 = vadd.f32 %v152, %v231
    %v239 = vadd.f32 %v157, %v235
    %v240 = vxor.u32 %v238, 2147483648
    %v241 = vxor.u32 %v239, 2147483648
    %v242 = vmul.f32 %v240, 1.442695
    %v243 = vpow.pop %v242
    %v244 = vmul.f32 %v241, 1.442695
    %v245 = vpow.pop %v244
    %v246 = vadd.f32 %v243, 1.0
    %v247 = vadd.f32 %v245, 1.0
    %v248 = vrcp.pop %v246
    %v249 = vmul.f32 1.0, %v248
    %v250 = vrcp.pop %v247
    %v251 = vmul.f32 1.0, %v250
    %v252 = vtanh.pop %v238
    %v253 = vtanh.pop %v239
    %v254 = vmul.f32 %v249, 0.0
    %v255 = vmul.f32 %v251, 0.0
    %258 = vrot.lane.b32.xlu0 %v252, 64
    %v259 = vpop.permute.xlu0 %258
    %260 = vrot.lane.b32.xlu0 %v253, 64
    %v261 = vpop.permute.xlu0 %260
    %v264 = vmul.f32 %v249, %v259
    %v265 = vmul.f32 %v251, %v261
    %268 = vrot.lane.b32.xlu0 %v264, 32
    %v269 = vpop.permute.xlu0 %268
    %270 = vrot.lane.b32.xlu0 %v265, 32
    %v271 = vpop.permute.xlu0 %270
    %v274 = vadd.f32 %v254, %v269
    %v275 = vadd.f32 %v255, %v271
    %v276 = vtanh.pop %v274
    %v277 = vtanh.pop %v275
    %280 = vrot.lane.b32.xlu0 %v276, 64
    %v281 = vpop.permute.xlu0 %280
    %282 = vrot.lane.b32.xlu0 %v277, 64
    %v283 = vpop.permute.xlu0 %282
    %v286 = vmul.f32 %v249, %v281
    %v287 = vmul.f32 %v251, %v283
    %v290 = vrot.slane %v287, 7
    %vm291 = vcmask 1041409
    %v292 = vsel %vm291, %v290, %v286
    %293 = vrot.lane.b32.xlu0 %v292, 32
    %v294 = vpop.permute.xlu0 %293
    %vm296 = vcmask 254976
    %297 = vst.msk [vmem:[#allocation2] sm:$0x3] %vm296, %v294
    %v298 = vsel %vm160, %v294, 0
    %300 = vmatprep.subr.mxu0 0.0
    %301 = vmatpush1.msra.mxu0 %v61
    %302 = vmatprep.subr.mxu0 0.0
    %303 = vmatpush1.msra.mxu0 %v62
    %304 = vmatprep.subr.mxu0 0.0
    %305 = vmatpush1.msra.mxu0 %v63
    %306 = vmatprep.subr.mxu0 0.0
    %307 = vmatpush1.msra.mxu0 %v64
    %308 = vmatprep.subr.mxu0 0.0
    %309 = vmatpush1.msra.mxu0 0.0
    %310 = vmatprep.subr.mxu0 0.0
    %311 = vmatpush1.msra.mxu0 0.0
    %312 = vmatprep.subr.mxu0 0.0
    %313 = vmatpush1.msra.mxu0 0.0
    %314 = vmatprep.subr.mxu0 0.0
    %315 = vmatpush1.msra.mxu0 0.0
    %316 = vmatprep.subr.mxu0 0.0
    %317 = vmatpush1.msra.mxu0 0.0
    %318 = vmatprep.subr.mxu0 0.0
    %319 = vmatpush1.msra.mxu0 0.0
    %320 = vmatprep.subr.mxu0 0.0
    %321 = vmatpush1.msra.mxu0 0.0
    %322 = vmatprep.subr.mxu0 0.0
    %323 = vmatpush1.msra.mxu0 0.0
    %324 = vmatprep.subr.mxu0 0.0
    %325 = vmatpush1.msra.mxu0 0.0
    %326 = vmatprep.subr.mxu0 0.0
    %327 = vmatpush1.msra.mxu0 0.0
    %328 = vmatprep.subr.mxu0 0.0
    %329 = vmatpush1.msra.mxu0 0.0
    %330 = vmatprep.subr.mxu0 0.0
    %331 = vmatpush1.msra.mxu0 0.0
    %332 = vmatprep.subr.mxu0 0.0
    %333 = vmatpush1.msra.mxu0 0.0
    %334 = vmatprep.subr.mxu0 0.0
    %335 = vmatpush1.msra.mxu0 0.0
    %336 = vmatprep.subr.mxu0 0.0
    %337 = vmatpush1.msra.mxu0 0.0
    %338 = vmatprep.subr.mxu0 0.0
    %339 = vmatpush1.msra.mxu0 0.0
    %340 = vmatprep.subr.mxu0 0.0
    %341 = vmatpush1.msra.mxu0 0.0
    %342 = vmatprep.subr.mxu0 0.0
    %343 = vmatpush1.msra.mxu0 0.0
    %344 = vmatprep.subr.mxu0 0.0
    %345 = vmatpush1.msra.mxu0 0.0
    %346 = vmatprep.subr.mxu0 0.0
    %347 = vmatpush1.msra.mxu0 0.0
    %348 = vmatprep.subr.mxu0 0.0
    %349 = vmatpush1.msra.mxu0 0.0
    %350 = vmatprep.subr.mxu0 0.0
    %351 = vmatpush1.msra.mxu0 0.0
    %352 = vmatprep.subr.mxu0 0.0
    %353 = vmatpush1.msra.mxu0 0.0
    %354 = vmatprep.subr.mxu0 0.0
    %355 = vmatpush1.msra.mxu0 0.0
    %356 = vmatprep.subr.mxu0 0.0
    %357 = vmatpush1.msra.mxu0 0.0
    %358 = vmatprep.subr.mxu0 0.0
    %359 = vmatpush1.msra.mxu0 0.0
    %360 = vmatprep.subr.mxu0 0.0
    %361 = vmatpush1.msra.mxu0 0.0
    %362 = vmatprep.subr.mxu0 0.0
    %363 = vmatpush1.msra.mxu0 0.0
    %364 = vmatprep.mubr.f32.mxu0 0.0
    %365 = vmatmul.mubr.f32.gmra.mrb[0].mxu0 %v298
    %v366 = vpop.f32.mrb[0].mxu0
    %v367 = vadd.f32 0.0, %v366
    %v368 = vpop.f32.mrb[0].mxu0
    %369 = vdwg.mxu0
    %v371 = vrot.slane %v367, 7
    %v374 = vadd.f32 %v152, %v371
    %v375 = vadd.f32 %v157, %v367
    %v376 = vxor.u32 %v374, 2147483648
    %v377 = vxor.u32 %v375, 2147483648
    %v378 = vmul.f32 %v376, 1.442695
    %v379 = vpow.pop %v378
    %v380 = vmul.f32 %v377, 1.442695
    %v381 = vpow.pop %v380
    %v382 = vadd.f32 %v379, 1.0
    %v383 = vadd.f32 %v381, 1.0
    %v384 = vrcp.pop %v382
    %v385 = vmul.f32 1.0, %v384
    %v386 = vrcp.pop %v383
    %v387 = vmul.f32 1.0, %v386
    %v388 = vtanh.pop %v374
    %v389 = vtanh.pop %v375
    %v392 = vrot.slane %v274, 7
    %v393 = vrot.slane %v275, 7
    %v396 = vmul.f32 %v385, %v392
    %v397 = vmul.f32 %v387, %v393
    %400 = vrot.lane.b32.xlu0 %v388, 64
    %v401 = vpop.permute.xlu0 %400
    %402 = vrot.lane.b32.xlu0 %v389, 64
    %v403 = vpop.permute.xlu0 %402
    %v406 = vmul.f32 %v385, %v401
    %v407 = vmul.f32 %v387, %v403
    %410 = vrot.lane.b32.xlu0 %v406, 32
    %v411 = vpop.permute.xlu0 %410
    %412 = vrot.lane.b32.xlu0 %v407, 32
    %v413 = vpop.permute.xlu0 %412
    %v416 = vadd.f32 %v396, %v411
    %v417 = vadd.f32 %v397, %v413
    %v418 = vtanh.pop %v416
    %v419 = vtanh.pop %v417
    %422 = vrot.lane.b32.xlu0 %v418, 64
    %v423 = vpop.permute.xlu0 %422
    %424 = vrot.lane.b32.xlu0 %v419, 64
    %v425 = vpop.permute.xlu0 %424
    %v428 = vmul.f32 %v385, %v423
    %v429 = vmul.f32 %v387, %v425
    %v432 = vrot.slane %v429, 7
    %vm433 = vcmask 1042434
    %v434 = vsel %vm433, %v432, %v428
    %435 = vrot.lane.b32.xlu0 %v434, 32
    %v436 = vpop.permute.xlu0 %435
    %vm438 = vcmask 256001
    %439 = vst.msk [vmem:[#allocation2 + $0x1] sm:$0x6] %vm438, %v436
    %v440 = vrot.slane %v428, 1
    %v441 = vsel %vm291, %v429, %v440
    %442 = vrot.lane.b32.xlu0 %v441, 32
    %v443 = vpop.permute.xlu0 %442
    %v444 = vsel %vm160, %v443, 0
    %446 = vmatprep.subr.mxu0 0.0
    %447 = vmatpush1.msra.mxu0 %v61
    %448 = vmatprep.subr.mxu0 0.0
    %449 = vmatpush1.msra.mxu0 %v62
    %450 = vmatprep.subr.mxu0 0.0
    %451 = vmatpush1.msra.mxu0 %v63
    %452 = vmatprep.subr.mxu0 0.0
    %453 = vmatpush1.msra.mxu0 %v64
    %454 = vmatprep.subr.mxu0 0.0
    %455 = vmatpush1.msra.mxu0 0.0
    %456 = vmatprep.subr.mxu0 0.0
    %457 = vmatpush1.msra.mxu0 0.0
    %458 = vmatprep.subr.mxu0 0.0
    %459 = vmatpush1.msra.mxu0 0.0
    %460 = vmatprep.subr.mxu0 0.0
    %461 = vmatpush1.msra.mxu0 0.0
    %462 = vmatprep.subr.mxu0 0.0
    %463 = vmatpush1.msra.mxu0 0.0
    %464 = vmatprep.subr.mxu0 0.0
    %465 = vmatpush1.msra.mxu0 0.0
    %466 = vmatprep.subr.mxu0 0.0
    %467 = vmatpush1.msra.mxu0 0.0
    %468 = vmatprep.subr.mxu0 0.0
    %469 = vmatpush1.msra.mxu0 0.0
    %470 = vmatprep.subr.mxu0 0.0
    %471 = vmatpush1.msra.mxu0 0.0
    %472 = vmatprep.subr.mxu0 0.0
    %473 = vmatpush1.msra.mxu0 0.0
    %474 = vmatprep.subr.mxu0 0.0
    %475 = vmatpush1.msra.mxu0 0.0
    %476 = vmatprep.subr.mxu0 0.0
    %477 = vmatpush1.msra.mxu0 0.0
    %478 = vmatprep.subr.mxu0 0.0
    %479 = vmatpush1.msra.mxu0 0.0
    %480 = vmatprep.subr.mxu0 0.0
    %481 = vmatpush1.msra.mxu0 0.0
    %482 = vmatprep.subr.mxu0 0.0
    %483 = vmatpush1.msra.mxu0 0.0
    %484 = vmatprep.subr.mxu0 0.0
    %485 = vmatpush1.msra.mxu0 0.0
    %486 = vmatprep.subr.mxu0 0.0
    %487 = vmatpush1.msra.mxu0 0.0
    %488 = vmatprep.subr.mxu0 0.0
    %489 = vmatpush1.msra.mxu0 0.0
    %490 = vmatprep.subr.mxu0 0.0
    %491 = vmatpush1.msra.mxu0 0.0
    %492 = vmatprep.subr.mxu0 0.0
    %493 = vmatpush1.msra.mxu0 0.0
    %494 = vmatprep.subr.mxu0 0.0
    %495 = vmatpush1.msra.mxu0 0.0
    %496 = vmatprep.subr.mxu0 0.0
    %497 = vmatpush1.msra.mxu0 0.0
    %498 = vmatprep.subr.mxu0 0.0
    %499 = vmatpush1.msra.mxu0 0.0
    %500 = vmatprep.subr.mxu0 0.0
    %501 = vmatpush1.msra.mxu0 0.0
    %502 = vmatprep.subr.mxu0 0.0
    %503 = vmatpush1.msra.mxu0 0.0
    %504 = vmatprep.subr.mxu0 0.0
    %505 = vmatpush1.msra.mxu0 0.0
    %506 = vmatprep.subr.mxu0 0.0
    %507 = vmatpush1.msra.mxu0 0.0
    %508 = vmatprep.subr.mxu0 0.0
    %509 = vmatpush1.msra.mxu0 0.0
    %510 = vmatprep.mubr.f32.mxu0 0.0
    %511 = vmatmul.mubr.f32.gmra.mrb[0].mxu0 %v444
    %v512 = vpop.f32.mrb[0].mxu0
    %v513 = vadd.f32 0.0, %v512
    %v514 = vpop.f32.mrb[0].mxu0
    %515 = vdwg.mxu0
    %v517 = vrot.slane %v513, 6
    %v518 = vrot.slane %v513, 7
    %v521 = vadd.f32 %v152, %v517
    %v522 = vadd.f32 %v157, %v518
    %v523 = vxor.u32 %v521, 2147483648
    %v524 = vxor.u32 %v522, 2147483648
    %v525 = vmul.f32 %v523, 1.442695
    %v526 = vpow.pop %v525
    %v527 = vmul.f32 %v524, 1.442695
    %v528 = vpow.pop %v527
    %v529 = vadd.f32 %v526, 1.0
    %v530 = vadd.f32 %v528, 1.0
    %v531 = vrcp.pop %v529
    %v532 = vmul.f32 1.0, %v531
    %v533 = vrcp.pop %v530
    %v534 = vmul.f32 1.0, %v533
    %v535 = vtanh.pop %v521
    %v536 = vtanh.pop %v522
    %v539 = vrot.slane %v416, 7
    %v540 = vrot.slane %v417, 7
    %v543 = vmul.f32 %v532, %v539
    %v544 = vmul.f32 %v534, %v540
    %547 = vrot.lane.b32.xlu0 %v535, 64
    %v548 = vpop.permute.xlu0 %547
    %549 = vrot.lane.b32.xlu0 %v536, 64
    %v550 = vpop.permute.xlu0 %549
    %v553 = vmul.f32 %v532, %v548
    %v554 = vmul.f32 %v534, %v550
    %557 = vrot.lane.b32.xlu0 %v553, 32
    %v558 = vpop.permute.xlu0 %557
    %559 = vrot.lane.b32.xlu0 %v554, 32
    %v560 = vpop.permute.xlu0 %559
    %v563 = vadd.f32 %v543, %v558
    %v564 = vadd.f32 %v544, %v560
    %v565 = vtanh.pop %v563
    %v566 = vtanh.pop %v564
    %569 = vrot.lane.b32.xlu0 %v565, 64
    %v570 = vpop.permute.xlu0 %569
    %571 = vrot.lane.b32.xlu0 %v566, 64
    %v572 = vpop.permute.xlu0 %571
    %v575 = vmul.f32 %v532, %v570
    %v576 = vmul.f32 %v534, %v572
    %v579 = vrot.slane %v576, 7
    %vm580 = vcmask 1043459
    %v581 = vsel %vm580, %v579, %v575
    %582 = vrot.lane.b32.xlu0 %v581, 32
    %v583 = vpop.permute.xlu0 %582
    %vm585 = vcmask 257026
    %586 = vst.msk [vmem:[#allocation2 + $0x2] sm:$0xc] %vm585, %v583
    %v587 = vrot.slane %v575, 2
    %v588 = vrot.slane %v576, 1
    %v589 = vsel %vm291, %v588, %v587
    %590 = vrot.lane.b32.xlu0 %v589, 32
    %v591 = vpop.permute.xlu0 %590
    %v592 = vsel %vm160, %v591, 0
    %594 = vmatprep.subr.mxu0 0.0
    %595 = vmatpush1.msra.mxu0 %v61
    %596 = vmatprep.subr.mxu0 0.0
    %597 = vmatpush1.msra.mxu0 %v62
    %598 = vmatprep.subr.mxu0 0.0
    %599 = vmatpush1.msra.mxu0 %v63
    %600 = vmatprep.subr.mxu0 0.0
    %601 = vmatpush1.msra.mxu0 %v64
    %602 = vmatprep.subr.mxu0 0.0
    %603 = vmatpush1.msra.mxu0 0.0
    %604 = vmatprep.subr.mxu0 0.0
    %605 = vmatpush1.msra.mxu0 0.0
    %606 = vmatprep.subr.mxu0 0.0
    %607 = vmatpush1.msra.mxu0 0.0
    %608 = vmatprep.subr.mxu0 0.0
    %609 = vmatpush1.msra.mxu0 0.0
    %610 = vmatprep.subr.mxu0 0.0
    %611 = vmatpush1.msra.mxu0 0.0
    %612 = vmatprep.subr.mxu0 0.0
    %613 = vmatpush1.msra.mxu0 0.0
    %614 = vmatprep.subr.mxu0 0.0
    %615 = vmatpush1.msra.mxu0 0.0
    %616 = vmatprep.subr.mxu0 0.0
    %617 = vmatpush1.msra.mxu0 0.0
    %618 = vmatprep.subr.mxu0 0.0
    %619 = vmatpush1.msra.mxu0 0.0
    %620 = vmatprep.subr.mxu0 0.0
    %621 = vmatpush1.msra.mxu0 0.0
    %622 = vmatprep.subr.mxu0 0.0
    %623 = vmatpush1.msra.mxu0 0.0
    %624 = vmatprep.subr.mxu0 0.0
    %625 = vmatpush1.msra.mxu0 0.0
    %626 = vmatprep.subr.mxu0 0.0
    %627 = vmatpush1.msra.mxu0 0.0
    %628 = vmatprep.subr.mxu0 0.0
    %629 = vmatpush1.msra.mxu0 0.0
    %630 = vmatprep.subr.mxu0 0.0
    %631 = vmatpush1.msra.mxu0 0.0
    %632 = vmatprep.subr.mxu0 0.0
    %633 = vmatpush1.msra.mxu0 0.0
    %634 = vmatprep.subr.mxu0 0.0
    %635 = vmatpush1.msra.mxu0 0.0
    %636 = vmatprep.subr.mxu0 0.0
    %637 = vmatpush1.msra.mxu0 0.0
    %638 = vmatprep.subr.mxu0 0.0
    %639 = vmatpush1.msra.mxu0 0.0
    %640 = vmatprep.subr.mxu0 0.0
    %641 = vmatpush1.msra.mxu0 0.0
    %642 = vmatprep.subr.mxu0 0.0
    %643 = vmatpush1.msra.mxu0 0.0
    %644 = vmatprep.subr.mxu0 0.0
    %645 = vmatpush1.msra.mxu0 0.0
    %646 = vmatprep.subr.mxu0 0.0
    %647 = vmatpush1.msra.mxu0 0.0
    %648 = vmatprep.subr.mxu0 0.0
    %649 = vmatpush1.msra.mxu0 0.0
    %650 = vmatprep.subr.mxu0 0.0
    %651 = vmatpush1.msra.mxu0 0.0
    %652 = vmatprep.subr.mxu0 0.0
    %653 = vmatpush1.msra.mxu0 0.0
    %654 = vmatprep.subr.mxu0 0.0
    %655 = vmatpush1.msra.mxu0 0.0
    %656 = vmatprep.subr.mxu0 0.0
    %657 = vmatpush1.msra.mxu0 0.0
    %658 = vmatprep.mubr.f32.mxu0 0.0
    %659 = vmatmul.mubr.f32.gmra.mrb[0].mxu0 %v592
    %v660 = vpop.f32.mrb[0].mxu0
    %v661 = vadd.f32 0.0, %v660
    %v662 = vpop.f32.mrb[0].mxu0
    %663 = vdwg.mxu0
    %v665 = vrot.slane %v661, 5
    %v666 = vrot.slane %v661, 6
    %v669 = vadd.f32 %v152, %v665
    %v670 = vadd.f32 %v157, %v666
    %v671 = vxor.u32 %v669, 2147483648
    %v672 = vxor.u32 %v670, 2147483648
    %v673 = vmul.f32 %v671, 1.442695
    %v674 = vpow.pop %v673
    %v675 = vmul.f32 %v672, 1.442695
    %v676 = vpow.pop %v675
    %v677 = vadd.f32 %v674, 1.0
    %v678 = vadd.f32 %v676, 1.0
    %v679 = vrcp.pop %v677
    %v680 = vmul.f32 1.0, %v679
    %v681 = vrcp.pop %v678
    %v682 = vmul.f32 1.0, %v681
    %v683 = vtanh.pop %v669
    %v684 = vtanh.pop %v670
    %v687 = vrot.slane %v563, 7
    %v688 = vrot.slane %v564, 7
    %v691 = vmul.f32 %v680, %v687
    %v692 = vmul.f32 %v682, %v688
    %695 = vrot.lane.b32.xlu0 %v683, 64
    %v696 = vpop.permute.xlu0 %695
    %697 = vrot.lane.b32.xlu0 %v684, 64
    %v698 = vpop.permute.xlu0 %697
    %v701 = vmul.f32 %v680, %v696
    %v702 = vmul.f32 %v682, %v698
    %705 = vrot.lane.b32.xlu0 %v701, 32
    %v706 = vpop.permute.xlu0 %705
    %707 = vrot.lane.b32.xlu0 %v702, 32
    %v708 = vpop.permute.xlu0 %707
    %v711 = vadd.f32 %v691, %v706
    %v712 = vadd.f32 %v692, %v708
    %v713 = vtanh.pop %v711
    %v714 = vtanh.pop %v712
    %717 = vrot.lane.b32.xlu0 %v713, 64
    %v718 = vpop.permute.xlu0 %717
    %719 = vrot.lane.b32.xlu0 %v714, 64
    %v720 = vpop.permute.xlu0 %719
    %v723 = vmul.f32 %v680, %v718
    %v724 = vmul.f32 %v682, %v720
    %v727 = vrot.slane %v724, 7
    %vm728 = vcmask 1044484
    %v729 = vsel %vm728, %v727, %v723
    %730 = vrot.lane.b32.xlu0 %v729, 32
    %v731 = vpop.permute.xlu0 %730
    %vm733 = vcmask 258051
    %734 = vst.msk [vmem:[#allocation2 + $0x3] sm:$0x18] %vm733, %v731
    %v735 = vrot.slane %v723, 3
    %v736 = vrot.slane %v724, 2
    %v737 = vsel %vm291, %v736, %v735
    %738 = vrot.lane.b32.xlu0 %v737, 32
    %v739 = vpop.permute.xlu0 %738
    %v740 = vsel %vm160, %v739, 0
    %742 = vmatprep.subr.mxu0 0.0
    %743 = vmatpush1.msra.mxu0 %v61
    %744 = vmatprep.subr.mxu0 0.0
    %745 = vmatpush1.msra.mxu0 %v62
    %746 = vmatprep.subr.mxu0 0.0
    %747 = vmatpush1.msra.mxu0 %v63
    %748 = vmatprep.subr.mxu0 0.0
    %749 = vmatpush1.msra.mxu0 %v64
    %750 = vmatprep.subr.mxu0 0.0
    %751 = vmatpush1.msra.mxu0 0.0
    %752 = vmatprep.subr.mxu0 0.0
    %753 = vmatpush1.msra.mxu0 0.0
    %754 = vmatprep.subr.mxu0 0.0
    %755 = vmatpush1.msra.mxu0 0.0
    %756 = vmatprep.subr.mxu0 0.0
    %757 = vmatpush1.msra.mxu0 0.0
    %758 = vmatprep.subr.mxu0 0.0
    %759 = vmatpush1.msra.mxu0 0.0
    %760 = vmatprep.subr.mxu0 0.0
    %761 = vmatpush1.msra.mxu0 0.0
    %762 = vmatprep.subr.mxu0 0.0
    %763 = vmatpush1.msra.mxu0 0.0
    %764 = vmatprep.subr.mxu0 0.0
    %765 = vmatpush1.msra.mxu0 0.0
    %766 = vmatprep.subr.mxu0 0.0
    %767 = vmatpush1.msra.mxu0 0.0
    %768 = vmatprep.subr.mxu0 0.0
    %769 = vmatpush1.msra.mxu0 0.0
    %770 = vmatprep.subr.mxu0 0.0
    %771 = vmatpush1.msra.mxu0 0.0
    %772 = vmatprep.subr.mxu0 0.0
    %773 = vmatpush1.msra.mxu0 0.0
    %774 = vmatprep.subr.mxu0 0.0
    %775 = vmatpush1.msra.mxu0 0.0
    %776 = vmatprep.subr.mxu0 0.0
    %777 = vmatpush1.msra.mxu0 0.0
    %778 = vmatprep.subr.mxu0 0.0
    %779 = vmatpush1.msra.mxu0 0.0
    %780 = vmatprep.subr.mxu0 0.0
    %781 = vmatpush1.msra.mxu0 0.0
    %782 = vmatprep.subr.mxu0 0.0
    %783 = vmatpush1.msra.mxu0 0.0
    %784 = vmatprep.subr.mxu0 0.0
    %785 = vmatpush1.msra.mxu0 0.0
    %786 = vmatprep.subr.mxu0 0.0
    %787 = vmatpush1.msra.mxu0 0.0
    %788 = vmatprep.subr.mxu0 0.0
    %789 = vmatpush1.msra.mxu0 0.0
    %790 = vmatprep.subr.mxu0 0.0
    %791 = vmatpush1.msra.mxu0 0.0
    %792 = vmatprep.subr.mxu0 0.0
    %793 = vmatpush1.msra.mxu0 0.0
    %794 = vmatprep.subr.mxu0 0.0
    %795 = vmatpush1.msra.mxu0 0.0
    %796 = vmatprep.subr.mxu0 0.0
    %797 = vmatpush1.msra.mxu0 0.0
    %798 = vmatprep.subr.mxu0 0.0
    %799 = vmatpush1.msra.mxu0 0.0
    %800 = vmatprep.subr.mxu0 0.0
    %801 = vmatpush1.msra.mxu0 0.0
    %802 = vmatprep.subr.mxu0 0.0
    %803 = vmatpush1.msra.mxu0 0.0
    %804 = vmatprep.subr.mxu0 0.0
    %805 = vmatpush1.msra.mxu0 0.0
    %806 = vmatprep.mubr.f32.mxu0 0.0
    %807 = vmatmul.mubr.f32.gmra.mrb[0].mxu0 %v740
    %v808 = vpop.f32.mrb[0].mxu0
    %v809 = vadd.f32 0.0, %v808
    %v810 = vpop.f32.mrb[0].mxu0
    %811 = vdwg.mxu0
    %v813 = vrot.slane %v809, 4
    %v814 = vrot.slane %v809, 5
    %v817 = vadd.f32 %v152, %v813
    %v818 = vadd.f32 %v157, %v814
    %v819 = vxor.u32 %v817, 2147483648
    %v820 = vxor.u32 %v818, 2147483648
    %v821 = vmul.f32 %v819, 1.442695
    %v822 = vpow.pop %v821
    %v823 = vmul.f32 %v820, 1.442695
    %v824 = vpow.pop %v823
    %v825 = vadd.f32 %v822, 1.0
    %v826 = vadd.f32 %v824, 1.0
    %v827 = vrcp.pop %v825
    %v828 = vmul.f32 1.0, %v827
    %v829 = vrcp.pop %v826
    %v830 = vmul.f32 1.0, %v829
    %v831 = vtanh.pop %v817
    %v832 = vtanh.pop %v818
    %v835 = vrot.slane %v711, 7
    %v836 = vrot.slane %v712, 7
    %v839 = vmul.f32 %v828, %v835
    %v840 = vmul.f32 %v830, %v836
    %843 = vrot.lane.b32.xlu0 %v831, 64
    %v844 = vpop.permute.xlu0 %843
    %845 = vrot.lane.b32.xlu0 %v832, 64
    %v846 = vpop.permute.xlu0 %845
    %v849 = vmul.f32 %v828, %v844
    %v850 = vmul.f32 %v830, %v846
    %853 = vrot.lane.b32.xlu0 %v849, 32
    %v854 = vpop.permute.xlu0 %853
    %855 = vrot.lane.b32.xlu0 %v850, 32
    %v856 = vpop.permute.xlu0 %855
    %v859 = vadd.f32 %v839, %v854
    %v860 = vadd.f32 %v840, %v856
    %v861 = vtanh.pop %v859
    %v862 = vtanh.pop %v860
    %865 = vrot.lane.b32.xlu0 %v861, 64
    %v866 = vpop.permute.xlu0 %865
    %867 = vrot.lane.b32.xlu0 %v862, 64
    %v868 = vpop.permute.xlu0 %867
    %v871 = vmul.f32 %v828, %v866
    %v872 = vmul.f32 %v830, %v868
    %v875 = vrot.slane %v872, 7
    %vm876 = vcmask 1045509
    %v877 = vsel %vm876, %v875, %v871
    %878 = vrot.lane.b32.xlu0 %v877, 32
    %v879 = vpop.permute.xlu0 %878
    %vm881 = vcmask 259076
    %882 = vst.msk [vmem:[#allocation2 + $0x4] sm:$0x30] %vm881, %v879
    %v883 = vrot.slane %v871, 4
    %v884 = vrot.slane %v872, 3
    %v885 = vsel %vm291, %v884, %v883
    %886 = vrot.lane.b32.xlu0 %v885, 32
    %v887 = vpop.permute.xlu0 %886
    %v888 = vsel %vm160, %v887, 0
    %890 = vmatprep.subr.mxu0 0.0
    %891 = vmatpush1.msra.mxu0 %v61
    %892 = vmatprep.subr.mxu0 0.0
    %893 = vmatpush1.msra.mxu0 %v62
    %894 = vmatprep.subr.mxu0 0.0
    %895 = vmatpush1.msra.mxu0 %v63
    %896 = vmatprep.subr.mxu0 0.0
    %897 = vmatpush1.msra.mxu0 %v64
    %898 = vmatprep.subr.mxu0 0.0
    %899 = vmatpush1.msra.mxu0 0.0
    %900 = vmatprep.subr.mxu0 0.0
    %901 = vmatpush1.msra.mxu0 0.0
    %902 = vmatprep.subr.mxu0 0.0
    %903 = vmatpush1.msra.mxu0 0.0
    %904 = vmatprep.subr.mxu0 0.0
    %905 = vmatpush1.msra.mxu0 0.0
    %906 = vmatprep.subr.mxu0 0.0
    %907 = vmatpush1.msra.mxu0 0.0
    %908 = vmatprep.subr.mxu0 0.0
    %909 = vmatpush1.msra.mxu0 0.0
    %910 = vmatprep.subr.mxu0 0.0
    %911 = vmatpush1.msra.mxu0 0.0
    %912 = vmatprep.subr.mxu0 0.0
    %913 = vmatpush1.msra.mxu0 0.0
    %914 = vmatprep.subr.mxu0 0.0
    %915 = vmatpush1.msra.mxu0 0.0
    %916 = vmatprep.subr.mxu0 0.0
    %917 = vmatpush1.msra.mxu0 0.0
    %918 = vmatprep.subr.mxu0 0.0
    %919 = vmatpush1.msra.mxu0 0.0
    %920 = vmatprep.subr.mxu0 0.0
    %921 = vmatpush1.msra.mxu0 0.0
    %922 = vmatprep.subr.mxu0 0.0
    %923 = vmatpush1.msra.mxu0 0.0
    %924 = vmatprep.subr.mxu0 0.0
    %925 = vmatpush1.msra.mxu0 0.0
    %926 = vmatprep.subr.mxu0 0.0
    %927 = vmatpush1.msra.mxu0 0.0
    %928 = vmatprep.subr.mxu0 0.0
    %929 = vmatpush1.msra.mxu0 0.0
    %930 = vmatprep.subr.mxu0 0.0
    %931 = vmatpush1.msra.mxu0 0.0
    %932 = vmatprep.subr.mxu0 0.0
    %933 = vmatpush1.msra.mxu0 0.0
    %934 = vmatprep.subr.mxu0 0.0
    %935 = vmatpush1.msra.mxu0 0.0
    %936 = vmatprep.subr.mxu0 0.0
    %937 = vmatpush1.msra.mxu0 0.0
    %938 = vmatprep.subr.mxu0 0.0
    %939 = vmatpush1.msra.mxu0 0.0
    %940 = vmatprep.subr.mxu0 0.0
    %941 = vmatpush1.msra.mxu0 0.0
    %942 = vmatprep.subr.mxu0 0.0
    %943 = vmatpush1.msra.mxu0 0.0
    %944 = vmatprep.subr.mxu0 0.0
    %945 = vmatpush1.msra.mxu0 0.0
    %946 = vmatprep.subr.mxu0 0.0
    %947 = vmatpush1.msra.mxu0 0.0
    %948 = vmatprep.subr.mxu0 0.0
    %949 = vmatpush1.msra.mxu0 0.0
    %950 = vmatprep.subr.mxu0 0.0
    %951 = vmatpush1.msra.mxu0 0.0
    %952 = vmatprep.subr.mxu0 0.0
    %953 = vmatpush1.msra.mxu0 0.0
    %954 = vmatprep.mubr.f32.mxu0 0.0
    %955 = vmatmul.mubr.f32.gmra.mrb[0].mxu0 %v888
    %v956 = vpop.f32.mrb[0].mxu0
    %v957 = vadd.f32 0.0, %v956
    %v958 = vpop.f32.mrb[0].mxu0
    %959 = vdwg.mxu0
    %v961 = vrot.slane %v957, 3
    %v962 = vrot.slane %v957, 4
    %v965 = vadd.f32 %v152, %v961
    %v966 = vadd.f32 %v157, %v962
    %v967 = vxor.u32 %v965, 2147483648
    %v968 = vxor.u32 %v966, 2147483648
    %v969 = vmul.f32 %v967, 1.442695
    %v970 = vpow.pop %v969
    %v971 = vmul.f32 %v968, 1.442695
    %v972 = vpow.pop %v971
    %v973 = vadd.f32 %v970, 1.0
    %v974 = vadd.f32 %v972, 1.0
    %v975 = vrcp.pop %v973
    %v976 = vmul.f32 1.0, %v975
    %v977 = vrcp.pop %v974
    %v978 = vmul.f32 1.0, %v977
    %v979 = vtanh.pop %v965
    %v980 = vtanh.pop %v966
    %v983 = vrot.slane %v859, 7
    %v984 = vrot.slane %v860, 7
    %v987 = vmul.f32 %v976, %v983
    %v988 = vmul.f32 %v978, %v984
    %991 = vrot.lane.b32.xlu0 %v979, 64
    %v992 = vpop.permute.xlu0 %991
    %993 = vrot.lane.b32.xlu0 %v980, 64
    %v994 = vpop.permute.xlu0 %993
    %v997 = vmul.f32 %v976, %v992
    %v998 = vmul.f32 %v978, %v994
    %1001 = vrot.lane.b32.xlu0 %v997, 32
    %v1002 = vpop.permute.xlu0 %1001
    %1003 = vrot.lane.b32.xlu0 %v998, 32
    %v1004 = vpop.permute.xlu0 %1003
    %v1007 = vadd.f32 %v987, %v1002
    %v1008 = vadd.f32 %v988, %v1004
    %v1009 = vtanh.pop %v1007
    %v1010 = vtanh.pop %v1008
    %1013 = vrot.lane.b32.xlu0 %v1009, 64
    %v1014 = vpop.permute.xlu0 %1013
    %1015 = vrot.lane.b32.xlu0 %v1010, 64
    %v1016 = vpop.permute.xlu0 %1015
    %v1019 = vmul.f32 %v976, %v1014
    %v1020 = vmul.f32 %v978, %v1016
    %v1023 = vrot.slane %v1020, 7
    %vm1024 = vcmask 1046534
    %v1025 = vsel %vm1024, %v1023, %v1019
    %1026 = vrot.lane.b32.xlu0 %v1025, 32
    %v1027 = vpop.permute.xlu0 %1026
    %vm1029 = vcmask 260101
    %1030 = vst.msk [vmem:[#allocation2 + $0x5] sm:$0x60] %vm1029, %v1027
    %v1031 = vrot.slane %v1019, 5
    %v1032 = vrot.slane %v1020, 4
    %v1033 = vsel %vm291, %v1032, %v1031
    %1034 = vrot.lane.b32.xlu0 %v1033, 32
    %v1035 = vpop.permute.xlu0 %1034
    %v1036 = vsel %vm160, %v1035, 0
    %1038 = vmatprep.subr.mxu0 0.0
    %1039 = vmatpush1.msra.mxu0 %v61
    %1040 = vmatprep.subr.mxu0 0.0
    %1041 = vmatpush1.msra.mxu0 %v62
    %1042 = vmatprep.subr.mxu0 0.0
    %1043 = vmatpush1.msra.mxu0 %v63
    %1044 = vmatprep.subr.mxu0 0.0
    %1045 = vmatpush1.msra.mxu0 %v64
    %1046 = vmatprep.subr.mxu0 0.0
    %1047 = vmatpush1.msra.mxu0 0.0
    %1048 = vmatprep.subr.mxu0 0.0
    %1049 = vmatpush1.msra.mxu0 0.0
    %1050 = vmatprep.subr.mxu0 0.0
    %1051 = vmatpush1.msra.mxu0 0.0
    %1052 = vmatprep.subr.mxu0 0.0
    %1053 = vmatpush1.msra.mxu0 0.0
    %1054 = vmatprep.subr.mxu0 0.0
    %1055 = vmatpush1.msra.mxu0 0.0
    %1056 = vmatprep.subr.mxu0 0.0
    %1057 = vmatpush1.msra.mxu0 0.0
    %1058 = vmatprep.subr.mxu0 0.0
    %1059 = vmatpush1.msra.mxu0 0.0
    %1060 = vmatprep.subr.mxu0 0.0
    %1061 = vmatpush1.msra.mxu0 0.0
    %1062 = vmatprep.subr.mxu0 0.0
    %1063 = vmatpush1.msra.mxu0 0.0
    %1064 = vmatprep.subr.mxu0 0.0
    %1065 = vmatpush1.msra.mxu0 0.0
    %1066 = vmatprep.subr.mxu0 0.0
    %1067 = vmatpush1.msra.mxu0 0.0
    %1068 = vmatprep.subr.mxu0 0.0
    %1069 = vmatpush1.msra.mxu0 0.0
    %1070 = vmatprep.subr.mxu0 0.0
    %1071 = vmatpush1.msra.mxu0 0.0
    %1072 = vmatprep.subr.mxu0 0.0
    %1073 = vmatpush1.msra.mxu0 0.0
    %1074 = vmatprep.subr.mxu0 0.0
    %1075 = vmatpush1.msra.mxu0 0.0
    %1076 = vmatprep.subr.mxu0 0.0
    %1077 = vmatpush1.msra.mxu0 0.0
    %1078 = vmatprep.subr.mxu0 0.0
    %1079 = vmatpush1.msra.mxu0 0.0
    %1080 = vmatprep.subr.mxu0 0.0
    %1081 = vmatpush1.msra.mxu0 0.0
    %1082 = vmatprep.subr.mxu0 0.0
    %1083 = vmatpush1.msra.mxu0 0.0
    %1084 = vmatprep.subr.mxu0 0.0
    %1085 = vmatpush1.msra.mxu0 0.0
    %1086 = vmatprep.subr.mxu0 0.0
    %1087 = vmatpush1.msra.mxu0 0.0
    %1088 = vmatprep.subr.mxu0 0.0
    %1089 = vmatpush1.msra.mxu0 0.0
    %1090 = vmatprep.subr.mxu0 0.0
    %1091 = vmatpush1.msra.mxu0 0.0
    %1092 = vmatprep.subr.mxu0 0.0
    %1093 = vmatpush1.msra.mxu0 0.0
    %1094 = vmatprep.subr.mxu0 0.0
    %1095 = vmatpush1.msra.mxu0 0.0
    %1096 = vmatprep.subr.mxu0 0.0
    %1097 = vmatpush1.msra.mxu0 0.0
    %1098 = vmatprep.subr.mxu0 0.0
    %1099 = vmatpush1.msra.mxu0 0.0
    %1100 = vmatprep.subr.mxu0 0.0
    %1101 = vmatpush1.msra.mxu0 0.0
    %1102 = vmatprep.mubr.f32.mxu0 0.0
    %1103 = vmatmul.mubr.f32.gmra.mrb[0].mxu0 %v1036
    %v1104 = vpop.f32.mrb[0].mxu0
    %v1105 = vadd.f32 0.0, %v1104
    %v1106 = vpop.f32.mrb[0].mxu0
    %1107 = vdwg.mxu0
    %v1109 = vrot.slane %v1105, 2
    %v1110 = vrot.slane %v1105, 3
    %v1113 = vadd.f32 %v152, %v1109
    %v1114 = vadd.f32 %v157, %v1110
    %v1115 = vxor.u32 %v1113, 2147483648
    %v1116 = vxor.u32 %v1114, 2147483648
    %v1117 = vmul.f32 %v1115, 1.442695
    %v1118 = vpow.pop %v1117
    %v1119 = vmul.f32 %v1116, 1.442695
    %v1120 = vpow.pop %v1119
    %v1121 = vadd.f32 %v1118, 1.0
    %v1122 = vadd.f32 %v1120, 1.0
    %v1123 = vrcp.pop %v1121
    %v1124 = vmul.f32 1.0, %v1123
    %v1125 = vrcp.pop %v1122
    %v1126 = vmul.f32 1.0, %v1125
    %v1127 = vtanh.pop %v1113
    %v1128 = vtanh.pop %v1114
    %v1131 = vrot.slane %v1007, 7
    %v1132 = vrot.slane %v1008, 7
    %v1135 = vmul.f32 %v1124, %v1131
    %v1136 = vmul.f32 %v1126, %v1132
    %1139 = vrot.lane.b32.xlu0 %v1127, 64
    %v1140 = vpop.permute.xlu0 %1139
    %1141 = vrot.lane.b32.xlu0 %v1128, 64
    %v1142 = vpop.permute.xlu0 %1141
    %v1145 = vmul.f32 %v1124, %v1140
    %v1146 = vmul.f32 %v1126, %v1142
    %1149 = vrot.lane.b32.xlu0 %v1145, 32
    %v1150 = vpop.permute.xlu0 %1149
    %1151 = vrot.lane.b32.xlu0 %v1146, 32
    %v1152 = vpop.permute.xlu0 %1151
    %v1155 = vadd.f32 %v1135, %v1150
    %v1156 = vadd.f32 %v1136, %v1152
    %v1157 = vtanh.pop %v1155
    %v1158 = vtanh.pop %v1156
    %1161 = vrot.lane.b32.xlu0 %v1157, 64
    %v1162 = vpop.permute.xlu0 %1161
    %1163 = vrot.lane.b32.xlu0 %v1158, 64
    %v1164 = vpop.permute.xlu0 %1163
    %v1167 = vmul.f32 %v1124, %v1162
    %v1168 = vmul.f32 %v1126, %v1164
    %v1171 = vrot.slane %v1168, 7
    %vm1172 = vcmask 1047559
    %v1173 = vsel %vm1172, %v1171, %v1167
    %1174 = vrot.lane.b32.xlu0 %v1173, 32
    %v1175 = vpop.permute.xlu0 %1174
    %vm1177 = vcmask 261126
    %1178 = vst.msk [vmem:[#allocation2 + $0x6] sm:$0xc0] %vm1177, %v1175
    %v1179 = vrot.slane %v1167, 6
    %v1180 = vrot.slane %v1168, 5
    %v1181 = vsel %vm291, %v1180, %v1179
    %1182 = vrot.lane.b32.xlu0 %v1181, 32
    %v1183 = vpop.permute.xlu0 %1182
    %v1184 = vsel %vm160, %v1183, 0
    %1186 = vmatprep.subr.mxu0 0.0
    %1187 = vmatpush1.msra.mxu0 %v61
    %1188 = vmatprep.subr.mxu0 0.0
    %1189 = vmatpush1.msra.mxu0 %v62
    %1190 = vmatprep.subr.mxu0 0.0
    %1191 = vmatpush1.msra.mxu0 %v63
    %1192 = vmatprep.subr.mxu0 0.0
    %1193 = vmatpush1.msra.mxu0 %v64
    %1194 = vmatprep.subr.mxu0 0.0
    %1195 = vmatpush1.msra.mxu0 0.0
    %1196 = vmatprep.subr.mxu0 0.0
    %1197 = vmatpush1.msra.mxu0 0.0
    %1198 = vmatprep.subr.mxu0 0.0
    %1199 = vmatpush1.msra.mxu0 0.0
    %1200 = vmatprep.subr.mxu0 0.0
    %1201 = vmatpush1.msra.mxu0 0.0
    %1202 = vmatprep.subr.mxu0 0.0
    %1203 = vmatpush1.msra.mxu0 0.0
    %1204 = vmatprep.subr.mxu0 0.0
    %1205 = vmatpush1.msra.mxu0 0.0
    %1206 = vmatprep.subr.mxu0 0.0
    %1207 = vmatpush1.msra.mxu0 0.0
    %1208 = vmatprep.subr.mxu0 0.0
    %1209 = vmatpush1.msra.mxu0 0.0
    %1210 = vmatprep.subr.mxu0 0.0
    %1211 = vmatpush1.msra.mxu0 0.0
    %1212 = vmatprep.subr.mxu0 0.0
    %1213 = vmatpush1.msra.mxu0 0.0
    %1214 = vmatprep.subr.mxu0 0.0
    %1215 = vmatpush1.msra.mxu0 0.0
    %1216 = vmatprep.subr.mxu0 0.0
    %1217 = vmatpush1.msra.mxu0 0.0
    %1218 = vmatprep.subr.mxu0 0.0
    %1219 = vmatpush1.msra.mxu0 0.0
    %1220 = vmatprep.subr.mxu0 0.0
    %1221 = vmatpush1.msra.mxu0 0.0
    %1222 = vmatprep.subr.mxu0 0.0
    %1223 = vmatpush1.msra.mxu0 0.0
    %1224 = vmatprep.subr.mxu0 0.0
    %1225 = vmatpush1.msra.mxu0 0.0
    %1226 = vmatprep.subr.mxu0 0.0
    %1227 = vmatpush1.msra.mxu0 0.0
    %1228 = vmatprep.subr.mxu0 0.0
    %1229 = vmatpush1.msra.mxu0 0.0
    %1230 = vmatprep.subr.mxu0 0.0
    %1231 = vmatpush1.msra.mxu0 0.0
    %1232 = vmatprep.subr.mxu0 0.0
    %1233 = vmatpush1.msra.mxu0 0.0
    %1234 = vmatprep.subr.mxu0 0.0
    %1235 = vmatpush1.msra.mxu0 0.0
    %1236 = vmatprep.subr.mxu0 0.0
    %1237 = vmatpush1.msra.mxu0 0.0
    %1238 = vmatprep.subr.mxu0 0.0
    %1239 = vmatpush1.msra.mxu0 0.0
    %1240 = vmatprep.subr.mxu0 0.0
    %1241 = vmatpush1.msra.mxu0 0.0
    %1242 = vmatprep.subr.mxu0 0.0
    %1243 = vmatpush1.msra.mxu0 0.0
    %1244 = vmatprep.subr.mxu0 0.0
    %1245 = vmatpush1.msra.mxu0 0.0
    %1246 = vmatprep.subr.mxu0 0.0
    %1247 = vmatpush1.msra.mxu0 0.0
    %1248 = vmatprep.subr.mxu0 0.0
    %1249 = vmatpush1.msra.mxu0 0.0
    %1250 = vmatprep.mubr.f32.mxu0 0.0
    %1251 = vmatmul.mubr.f32.gmra.mrb[0].mxu0 %v1184
    %v1252 = vpop.f32.mrb[0].mxu0
    %v1253 = vadd.f32 0.0, %v1252
    %v1254 = vpop.f32.mrb[0].mxu0
    %1255 = vdwg.mxu0
    %v1257 = vrot.slane %v1253, 1
    %v1258 = vrot.slane %v1253, 2
    %v1261 = vadd.f32 %v152, %v1257
    %v1262 = vadd.f32 %v157, %v1258
    %v1263 = vxor.u32 %v1261, 2147483648
    %v1264 = vxor.u32 %v1262, 2147483648
    %v1265 = vmul.f32 %v1263, 1.442695
    %v1266 = vpow.pop %v1265
    %v1267 = vmul.f32 %v1264, 1.442695
    %v1268 = vpow.pop %v1267
    %v1269 = vadd.f32 %v1266, 1.0
    %v1270 = vadd.f32 %v1268, 1.0
    %v1271 = vrcp.pop %v1269
    %v1272 = vmul.f32 1.0, %v1271
    %v1273 = vrcp.pop %v1270
    %v1274 = vmul.f32 1.0, %v1273
    %v1275 = vtanh.pop %v1261
    %v1276 = vtanh.pop %v1262
    %v1279 = vrot.slane %v1155, 7
    %v1280 = vrot.slane %v1156, 7
    %v1283 = vmul.f32 %v1272, %v1279
    %v1284 = vmul.f32 %v1274, %v1280
    %1287 = vrot.lane.b32.xlu0 %v1275, 64
    %v1288 = vpop.permute.xlu0 %1287
    %1289 = vrot.lane.b32.xlu0 %v1276, 64
    %v1290 = vpop.permute.xlu0 %1289
    %v1293 = vmul.f32 %v1272, %v1288
    %v1294 = vmul.f32 %v1274, %v1290
    %1297 = vrot.lane.b32.xlu0 %v1293, 32
    %v1298 = vpop.permute.xlu0 %1297
    %1299 = vrot.lane.b32.xlu0 %v1294, 32
    %v1300 = vpop.permute.xlu0 %1299
    %v1303 = vadd.f32 %v1283, %v1298
    %v1304 = vadd.f32 %v1284, %v1300
    %v1305 = vtanh.pop %v1303
    %v1306 = vtanh.pop %v1304
    %1309 = vrot.lane.b32.xlu0 %v1305, 64
    %v1310 = vpop.permute.xlu0 %1309
    %1311 = vrot.lane.b32.xlu0 %v1306, 64
    %v1312 = vpop.permute.xlu0 %1311
    %v1315 = vmul.f32 %v1272, %v1310
    %v1316 = vmul.f32 %v1274, %v1312
    %v1319 = vrot.slane %v1316, 7
    %1320 = vrot.lane.b32.xlu0 %v1315, 32
    %v1321 = vpop.permute.xlu0 %1320
    %1322 = vrot.lane.b32.xlu0 %v1319, 32
    %v1323 = vpop.permute.xlu0 %1322
    %vm1326 = vcmask 261127
    %1327 = vst.msk [vmem:[#allocation2 + $0x7] sm:$0x80] %vm1326, %v1321
    %vm1328 = vcmask 253952
    %1329 = vst.msk [vmem:[#allocation2 + $0xf] sm:$0x1] %vm1328, %v1323
    %v1330 = vld [vmem:[%s4] sm:$0xff]
    %v1331 = vld [vmem:[%s4 + $0x8] sm:$0xff]
    %v1332 = vld [vmem:[%s4 + $0x10] sm:$0xff]
    %v1333 = vld [vmem:[%s4 + $0x18] sm:$0xff]
    %v1334 = vld [vmem:[#allocation6] sm:$0xff]
    %v1335 = vld [vmem:[#allocation6 + $0x8] sm:$0xff]
    %v1336 = vld [vmem:[#allocation6 + $0x10] sm:$0xff]
    %v1337 = vld [vmem:[#allocation6 + $0x18] sm:$0xff]
    %v1338 = vld [vmem:[%s6] sm:$0x1]
    %v1339 = vld [vmem:[#allocation2] sm:$0xff]
    %v1340 = vld [vmem:[#allocation2 + $0x8] sm:$0xff]
    %v1342 = vlaneseq
    %v1343 = vshrl.u32 %v1342, 7
    %v1344 = vsub.s32 0, %v1343
    %v1345 = vrot.slane %v1338, %v1344
    %v1348 = vsel %vm160, %v1339, 0
    %v1351 = vsel %vm160, %v1340, 0
    %1353 = vmatprep.subr.mxu0 0.0
    %1354 = vmatpush1.msra.mxu0 %v1330
    %1355 = vmatprep.subr.mxu0 0.0
    %1356 = vmatpush1.msra.mxu0 %v1331
    %1357 = vmatprep.subr.mxu0 0.0
    %1358 = vmatpush1.msra.mxu0 %v1332
    %1359 = vmatprep.subr.mxu0 0.0
    %1360 = vmatpush1.msra.mxu0 %v1333
    %1361 = vmatprep.subr.mxu0 0.0
    %1362 = vmatpush1.msra.mxu0 0.0
    %1363 = vmatprep.subr.mxu0 0.0
    %1364 = vmatpush1.msra.mxu0 0.0
    %1365 = vmatprep.subr.mxu0 0.0
    %1366 = vmatpush1.msra.mxu0 0.0
    %1367 = vmatprep.subr.mxu0 0.0
    %1368 = vmatpush1.msra.mxu0 0.0
    %1369 = vmatprep.subr.mxu0 0.0
    %1370 = vmatpush1.msra.mxu0 0.0
    %1371 = vmatprep.subr.mxu0 0.0
    %1372 = vmatpush1.msra.mxu0 0.0
    %1373 = vmatprep.subr.mxu0 0.0
    %1374 = vmatpush1.msra.mxu0 0.0
    %1375 = vmatprep.subr.mxu0 0.0
    %1376 = vmatpush1.msra.mxu0 0.0
    %1377 = vmatprep.subr.mxu0 0.0
    %1378 = vmatpush1.msra.mxu0 0.0
    %1379 = vmatprep.subr.mxu0 0.0
    %1380 = vmatpush1.msra.mxu0 0.0
    %1381 = vmatprep.subr.mxu0 0.0
    %1382 = vmatpush1.msra.mxu0 0.0
    %1383 = vmatprep.subr.mxu0 0.0
    %1384 = vmatpush1.msra.mxu0 0.0
    %1385 = vmatprep.subr.mxu0 0.0
    %1386 = vmatpush1.msra.mxu0 0.0
    %1387 = vmatprep.subr.mxu0 0.0
    %1388 = vmatpush1.msra.mxu0 0.0
    %1389 = vmatprep.subr.mxu0 0.0
    %1390 = vmatpush1.msra.mxu0 0.0
    %1391 = vmatprep.subr.mxu0 0.0
    %1392 = vmatpush1.msra.mxu0 0.0
    %1393 = vmatprep.subr.mxu0 0.0
    %1394 = vmatpush1.msra.mxu0 0.0
    %1395 = vmatprep.subr.mxu0 0.0
    %1396 = vmatpush1.msra.mxu0 0.0
    %1397 = vmatprep.subr.mxu0 0.0
    %1398 = vmatpush1.msra.mxu0 0.0
    %1399 = vmatprep.subr.mxu0 0.0
    %1400 = vmatpush1.msra.mxu0 0.0
    %1401 = vmatprep.subr.mxu0 0.0
    %1402 = vmatpush1.msra.mxu0 0.0
    %1403 = vmatprep.subr.mxu0 0.0
    %1404 = vmatpush1.msra.mxu0 0.0
    %1405 = vmatprep.subr.mxu0 0.0
    %1406 = vmatpush1.msra.mxu0 0.0
    %1407 = vmatprep.subr.mxu0 0.0
    %1408 = vmatpush1.msra.mxu0 0.0
    %1409 = vmatprep.subr.mxu0 0.0
    %1410 = vmatpush1.msra.mxu0 0.0
    %1411 = vmatprep.subr.mxu0 0.0
    %1412 = vmatpush1.msra.mxu0 0.0
    %1413 = vmatprep.subr.mxu0 0.0
    %1414 = vmatpush1.msra.mxu0 0.0
    %1415 = vmatprep.subr.mxu0 0.0
    %1416 = vmatpush1.msra.mxu0 0.0
    %1417 = vmatprep.mubr.f32.mxu0 0.0
    %1418 = vmatmul.mubr.f32.gmra.mrb[0].mxu0 %v1348
    %v1419 = vpop.f32.mrb[0].mxu0
    %v1420 = vadd.f32 %v1345, %v1419
    %v1421 = vpop.f32.mrb[0].mxu0
    %1422 = vmatprep.mubr.f32.mxu0 0.0
    %1423 = vmatmul.mubr.f32.gmra.mrb[0].mxu0 %v1351
    %v1424 = vpop.f32.mrb[0].mxu0
    %v1425 = vadd.f32 %v1345, %v1424
    %v1426 = vpop.f32.mrb[0].mxu0
    %1427 = vdwg.mxu0
    %1428 = vmatprep.subr.mxu0 0.0
    %1429 = vmatpush1.msra.mxu0 %v1334
    %1430 = vmatprep.subr.mxu0 0.0
    %1431 = vmatpush1.msra.mxu0 %v1335
    %1432 = vmatprep.subr.mxu0 0.0
    %1433 = vmatpush1.msra.mxu0 %v1336
    %1434 = vmatprep.subr.mxu0 0.0
    %1435 = vmatpush1.msra.mxu0 %v1337
    %1436 = vmatprep.subr.mxu0 0.0
    %1437 = vmatpush1.msra.mxu0 0.0
    %1438 = vmatprep.subr.mxu0 0.0
    %1439 = vmatpush1.msra.mxu0 0.0
    %1440 = vmatprep.subr.mxu0 0.0
    %1441 = vmatpush1.msra.mxu0 0.0
    %1442 = vmatprep.subr.mxu0 0.0
    %1443 = vmatpush1.msra.mxu0 0.0
    %1444 = vmatprep.subr.mxu0 0.0
    %1445 = vmatpush1.msra.mxu0 0.0
    %1446 = vmatprep.subr.mxu0 0.0
    %1447 = vmatpush1.msra.mxu0 0.0
    %1448 = vmatprep.subr.mxu0 0.0
    %1449 = vmatpush1.msra.mxu0 0.0
    %1450 = vmatprep.subr.mxu0 0.0
    %1451 = vmatpush1.msra.mxu0 0.0
    %1452 = vmatprep.subr.mxu0 0.0
    %1453 = vmatpush1.msra.mxu0 0.0
    %1454 = vmatprep.subr.mxu0 0.0
    %1455 = vmatpush1.msra.mxu0 0.0
    %1456 = vmatprep.subr.mxu0 0.0
    %1457 = vmatpush1.msra.mxu0 0.0
    %1458 = vmatprep.subr.mxu0 0.0
    %1459 = vmatpush1.msra.mxu0 0.0
    %1460 = vmatprep.subr.mxu0 0.0
    %1461 = vmatpush1.msra.mxu0 0.0
    %1462 = vmatprep.subr.mxu0 0.0
    %1463 = vmatpush1.msra.mxu0 0.0
    %1464 = vmatprep.subr.mxu0 0.0
    %1465 = vmatpush1.msra.mxu0 0.0
    %1466 = vmatprep.subr.mxu0 0.0
    %1467 = vmatpush1.msra.mxu0 0.0
    %1468 = vmatprep.subr.mxu0 0.0
    %1469 = vmatpush1.msra.mxu0 0.0
    %1470 = vmatprep.subr.mxu0 0.0
    %1471 = vmatpush1.msra.mxu0 0.0
    %1472 = vmatprep.subr.mxu0 0.0
    %1473 = vmatpush1.msra.mxu0 0.0
    %1474 = vmatprep.subr.mxu0 0.0
    %1475 = vmatpush1.msra.mxu0 0.0
    %1476 = vmatprep.subr.mxu0 0.0
    %1477 = vmatpush1.msra.mxu0 0.0
    %1478 = vmatprep.subr.mxu0 0.0
    %1479 = vmatpush1.msra.mxu0 0.0
    %1480 = vmatprep.subr.mxu0 0.0
    %1481 = vmatpush1.msra.mxu0 0.0
    %1482 = vmatprep.subr.mxu0 0.0
    %1483 = vmatpush1.msra.mxu0 0.0
    %1484 = vmatprep.subr.mxu0 0.0
    %1485 = vmatpush1.msra.mxu0 0.0
    %1486 = vmatprep.subr.mxu0 0.0
    %1487 = vmatpush1.msra.mxu0 0.0
    %1488 = vmatprep.subr.mxu0 0.0
    %1489 = vmatpush1.msra.mxu0 0.0
    %1490 = vmatprep.subr.mxu0 0.0
    %1491 = vmatpush1.msra.mxu0 0.0
    %1492 = vmatprep.mubr.f32.mxu0 0.0
    %1493 = vmatmul.mubr.f32.gmra.mrb[0].mxu0 %v162
    %v1494 = vpop.f32.mrb[0].mxu0
    %v1495 = vadd.f32 0.0, %v1494
    %v1496 = vpop.f32.mrb[0].mxu0
    %1497 = vdwg.mxu0
    %v1498 = vadd.f32 %v1420, %v1495
    %v1499 = vxor.u32 %v1498, 2147483648
    %v1500 = vmul.f32 %v1499, 1.442695
    %v1501 = vpow.pop %v1500
    %v1502 = vadd.f32 %v1501, 1.0
    %v1503 = vrcp.pop %v1502
    %v1504 = vmul.f32 1.0, %v1503
    %v1505 = vtanh.pop %v1498
    %v1506 = vmul.f32 %v1504, 0.0
    %1508 = vrot.lane.b32.xlu0 %v1505, 64
    %v1509 = vpop.permute.xlu0 %1508
    %v1511 = vmul.f32 %v1504, %v1509
    %1513 = vrot.lane.b32.xlu0 %v1511, 32
    %v1514 = vpop.permute.xlu0 %1513
    %v1516 = vadd.f32 %v1506, %v1514
    %v1517 = vtanh.pop %v1516
    %1519 = vrot.lane.b32.xlu0 %v1517, 64
    %v1520 = vpop.permute.xlu0 %1519
    %v1522 = vmul.f32 %v1504, %v1520
    %1524 = vrot.lane.b32.xlu0 %v1522, 32
    %v1525 = vpop.permute.xlu0 %1524
    %1527 = vst.msk [vmem:[#allocation2] sm:$0x3] %vm296, %v1525
    %v1528 = vsel %vm160, %v1525, 0
    %1530 = vmatprep.subr.mxu0 0.0
    %1531 = vmatpush1.msra.mxu0 %v1334
    %1532 = vmatprep.subr.mxu0 0.0
    %1533 = vmatpush1.msra.mxu0 %v1335
    %1534 = vmatprep.subr.mxu0 0.0
    %1535 = vmatpush1.msra.mxu0 %v1336
    %1536 = vmatprep.subr.mxu0 0.0
    %1537 = vmatpush1.msra.mxu0 %v1337
    %1538 = vmatprep.subr.mxu0 0.0
    %1539 = vmatpush1.msra.mxu0 0.0
    %1540 = vmatprep.subr.mxu0 0.0
    %1541 = vmatpush1.msra.mxu0 0.0
    %1542 = vmatprep.subr.mxu0 0.0
    %1543 = vmatpush1.msra.mxu0 0.0
    %1544 = vmatprep.subr.mxu0 0.0
    %1545 = vmatpush1.msra.mxu0 0.0
    %1546 = vmatprep.subr.mxu0 0.0
    %1547 = vmatpush1.msra.mxu0 0.0
    %1548 = vmatprep.subr.mxu0 0.0
    %1549 = vmatpush1.msra.mxu0 0.0
    %1550 = vmatprep.subr.mxu0 0.0
    %1551 = vmatpush1.msra.mxu0 0.0
    %1552 = vmatprep.subr.mxu0 0.0
    %1553 = vmatpush1.msra.mxu0 0.0
    %1554 = vmatprep.subr.mxu0 0.0
    %1555 = vmatpush1.msra.mxu0 0.0
    %1556 = vmatprep.subr.mxu0 0.0
    %1557 = vmatpush1.msra.mxu0 0.0
    %1558 = vmatprep.subr.mxu0 0.0
    %1559 = vmatpush1.msra.mxu0 0.0
    %1560 = vmatprep.subr.mxu0 0.0
    %1561 = vmatpush1.msra.mxu0 0.0
    %1562 = vmatprep.subr.mxu0 0.0
    %1563 = vmatpush1.msra.mxu0 0.0
    %1564 = vmatprep.subr.mxu0 0.0
    %1565 = vmatpush1.msra.mxu0 0.0
    %1566 = vmatprep.subr.mxu0 0.0
    %1567 = vmatpush1.msra.mxu0 0.0
    %1568 = vmatprep.subr.mxu0 0.0
    %1569 = vmatpush1.msra.mxu0 0.0
    %1570 = vmatprep.subr.mxu0 0.0
    %1571 = vmatpush1.msra.mxu0 0.0
    %1572 = vmatprep.subr.mxu0 0.0
    %1573 = vmatpush1.msra.mxu0 0.0
    %1574 = vmatprep.subr.mxu0 0.0
    %1575 = vmatpush1.msra.mxu0 0.0
    %1576 = vmatprep.subr.mxu0 0.0
    %1577 = vmatpush1.msra.mxu0 0.0
    %1578 = vmatprep.subr.mxu0 0.0
    %1579 = vmatpush1.msra.mxu0 0.0
    %1580 = vmatprep.subr.mxu0 0.0
    %1581 = vmatpush1.msra.mxu0 0.0
    %1582 = vmatprep.subr.mxu0 0.0
    %1583 = vmatpush1.msra.mxu0 0.0
    %1584 = vmatprep.subr.mxu0 0.0
    %1585 = vmatpush1.msra.mxu0 0.0
    %1586 = vmatprep.subr.mxu0 0.0
    %1587 = vmatpush1.msra.mxu0 0.0
    %1588 = vmatprep.subr.mxu0 0.0
    %1589 = vmatpush1.msra.mxu0 0.0
    %1590 = vmatprep.subr.mxu0 0.0
    %1591 = vmatpush1.msra.mxu0 0.0
    %1592 = vmatprep.subr.mxu0 0.0
    %1593 = vmatpush1.msra.mxu0 0.0
    %1594 = vmatprep.mubr.f32.mxu0 0.0
    %1595 = vmatmul.mubr.f32.gmra.mrb[0].mxu0 %v1528
    %v1596 = vpop.f32.mrb[0].mxu0
    %v1597 = vadd.f32 0.0, %v1596
    %v1598 = vpop.f32.mrb[0].mxu0
    %1599 = vdwg.mxu0
    %v1601 = vrot.slane %v1597, 6
    %v1603 = vadd.f32 %v1420, %v1601
    %v1604 = vxor.u32 %v1603, 2147483648
    %v1605 = vmul.f32 %v1604, 1.442695
    %v1606 = vpow.pop %v1605
    %v1607 = vadd.f32 %v1606, 1.0
    %v1608 = vrcp.pop %v1607
    %v1609 = vmul.f32 1.0, %v1608
    %v1610 = vtanh.pop %v1603
    %v1612 = vrot.slane %v1516, 6
    %v1614 = vmul.f32 %v1609, %v1612
    %1616 = vrot.lane.b32.xlu0 %v1610, 64
    %v1617 = vpop.permute.xlu0 %1616
    %v1619 = vmul.f32 %v1609, %v1617
    %1621 = vrot.lane.b32.xlu0 %v1619, 32
    %v1622 = vpop.permute.xlu0 %1621
    %v1624 = vadd.f32 %v1614, %v1622
    %v1625 = vtanh.pop %v1624
    %1627 = vrot.lane.b32.xlu0 %v1625, 64
    %v1628 = vpop.permute.xlu0 %1627
    %v1630 = vmul.f32 %v1609, %v1628
    %1632 = vrot.lane.b32.xlu0 %v1630, 32
    %v1633 = vpop.permute.xlu0 %1632
    %1635 = vst.msk [vmem:[#allocation2] sm:$0xc] %vm585, %v1633
    %v1636 = vrot.slane %v1630, 2
    %1637 = vrot.lane.b32.xlu0 %v1636, 32
    %v1638 = vpop.permute.xlu0 %1637
    %v1639 = vsel %vm160, %v1638, 0
    %1641 = vmatprep.subr.mxu0 0.0
    %1642 = vmatpush1.msra.mxu0 %v1334
    %1643 = vmatprep.subr.mxu0 0.0
    %1644 = vmatpush1.msra.mxu0 %v1335
    %1645 = vmatprep.subr.mxu0 0.0
    %1646 = vmatpush1.msra.mxu0 %v1336
    %1647 = vmatprep.subr.mxu0 0.0
    %1648 = vmatpush1.msra.mxu0 %v1337
    %1649 = vmatprep.subr.mxu0 0.0
    %1650 = vmatpush1.msra.mxu0 0.0
    %1651 = vmatprep.subr.mxu0 0.0
    %1652 = vmatpush1.msra.mxu0 0.0
    %1653 = vmatprep.subr.mxu0 0.0
    %1654 = vmatpush1.msra.mxu0 0.0
    %1655 = vmatprep.subr.mxu0 0.0
    %1656 = vmatpush1.msra.mxu0 0.0
    %1657 = vmatprep.subr.mxu0 0.0
    %1658 = vmatpush1.msra.mxu0 0.0
    %1659 = vmatprep.subr.mxu0 0.0
    %1660 = vmatpush1.msra.mxu0 0.0
    %1661 = vmatprep.subr.mxu0 0.0
    %1662 = vmatpush1.msra.mxu0 0.0
    %1663 = vmatprep.subr.mxu0 0.0
    %1664 = vmatpush1.msra.mxu0 0.0
    %1665 = vmatprep.subr.mxu0 0.0
    %1666 = vmatpush1.msra.mxu0 0.0
    %1667 = vmatprep.subr.mxu0 0.0
    %1668 = vmatpush1.msra.mxu0 0.0
    %1669 = vmatprep.subr.mxu0 0.0
    %1670 = vmatpush1.msra.mxu0 0.0
    %1671 = vmatprep.subr.mxu0 0.0
    %1672 = vmatpush1.msra.mxu0 0.0
    %1673 = vmatprep.subr.mxu0 0.0
    %1674 = vmatpush1.msra.mxu0 0.0
    %1675 = vmatprep.subr.mxu0 0.0
    %1676 = vmatpush1.msra.mxu0 0.0
    %1677 = vmatprep.subr.mxu0 0.0
    %1678 = vmatpush1.msra.mxu0 0.0
    %1679 = vmatprep.subr.mxu0 0.0
    %1680 = vmatpush1.msra.mxu0 0.0
    %1681 = vmatprep.subr.mxu0 0.0
    %1682 = vmatpush1.msra.mxu0 0.0
    %1683 = vmatprep.subr.mxu0 0.0
    %1684 = vmatpush1.msra.mxu0 0.0
    %1685 = vmatprep.subr.mxu0 0.0
    %1686 = vmatpush1.msra.mxu0 0.0
    %1687 = vmatprep.subr.mxu0 0.0
    %1688 = vmatpush1.msra.mxu0 0.0
    %1689 = vmatprep.subr.mxu0 0.0
    %1690 = vmatpush1.msra.mxu0 0.0
    %1691 = vmatprep.subr.mxu0 0.0
    %1692 = vmatpush1.msra.mxu0 0.0
    %1693 = vmatprep.subr.mxu0 0.0
    %1694 = vmatpush1.msra.mxu0 0.0
    %1695 = vmatprep.subr.mxu0 0.0
    %1696 = vmatpush1.msra.mxu0 0.0
    %1697 = vmatprep.subr.mxu0 0.0
    %1698 = vmatpush1.msra.mxu0 0.0
    %1699 = vmatprep.subr.mxu0 0.0
    %1700 = vmatpush1.msra.mxu0 0.0
    %1701 = vmatprep.subr.mxu0 0.0
    %1702 = vmatpush1.msra.mxu0 0.0
    %1703 = vmatprep.subr.mxu0 0.0
    %1704 = vmatpush1.msra.mxu0 0.0
    %1705 = vmatprep.mubr.f32.mxu0 0.0
    %1706 = vmatmul.mubr.f32.gmra.mrb[0].mxu0 %v1639
    %v1707 = vpop.f32.mrb[0].mxu0
    %v1708 = vadd.f32 0.0, %v1707
    %v1709 = vpop.f32.mrb[0].mxu0
    %1710 = vdwg.mxu0
    %v1712 = vrot.slane %v1708, 4
    %v1714 = vadd.f32 %v1420, %v1712
    %v1715 = vxor.u32 %v1714, 2147483648
    %v1716 = vmul.f32 %v1715, 1.442695
    %v1717 = vpow.pop %v1716
    %v1718 = vadd.f32 %v1717, 1.0
    %v1719 = vrcp.pop %v1718
    %v1720 = vmul.f32 1.0, %v1719
    %v1721 = vtanh.pop %v1714
    %v1723 = vrot.slane %v1624, 6
    %v1725 = vmul.f32 %v1720, %v1723
    %1727 = vrot.lane.b32.xlu0 %v1721, 64
    %v1728 = vpop.permute.xlu0 %1727
    %v1730 = vmul.f32 %v1720, %v1728
    %1732 = vrot.lane.b32.xlu0 %v1730, 32
    %v1733 = vpop.permute.xlu0 %1732
    %v1735 = vadd.f32 %v1725, %v1733
    %v1736 = vtanh.pop %v1735
    %1738 = vrot.lane.b32.xlu0 %v1736, 64
    %v1739 = vpop.permute.xlu0 %1738
    %v1741 = vmul.f32 %v1720, %v1739
    %1743 = vrot.lane.b32.xlu0 %v1741, 32
    %v1744 = vpop.permute.xlu0 %1743
    %1746 = vst.msk [vmem:[#allocation2] sm:$0x30] %vm881, %v1744
    %v1747 = vrot.slane %v1741, 4
    %1748 = vrot.lane.b32.xlu0 %v1747, 32
    %v1749 = vpop.permute.xlu0 %1748
    %v1750 = vsel %vm160, %v1749, 0
    %1752 = vmatprep.subr.mxu0 0.0
    %1753 = vmatpush1.msra.mxu0 %v1334
    %1754 = vmatprep.subr.mxu0 0.0
    %1755 = vmatpush1.msra.mxu0 %v1335
    %1756 = vmatprep.subr.mxu0 0.0
    %1757 = vmatpush1.msra.mxu0 %v1336
    %1758 = vmatprep.subr.mxu0 0.0
    %1759 = vmatpush1.msra.mxu0 %v1337
    %1760 = vmatprep.subr.mxu0 0.0
    %1761 = vmatpush1.msra.mxu0 0.0
    %1762 = vmatprep.subr.mxu0 0.0
    %1763 = vmatpush1.msra.mxu0 0.0
    %1764 = vmatprep.subr.mxu0 0.0
    %1765 = vmatpush1.msra.mxu0 0.0
    %1766 = vmatprep.subr.mxu0 0.0
    %1767 = vmatpush1.msra.mxu0 0.0
    %1768 = vmatprep.subr.mxu0 0.0
    %1769 = vmatpush1.msra.mxu0 0.0
    %1770 = vmatprep.subr.mxu0 0.0
    %1771 = vmatpush1.msra.mxu0 0.0
    %1772 = vmatprep.subr.mxu0 0.0
    %1773 = vmatpush1.msra.mxu0 0.0
    %1774 = vmatprep.subr.mxu0 0.0
    %1775 = vmatpush1.msra.mxu0 0.0
    %1776 = vmatprep.subr.mxu0 0.0
    %1777 = vmatpush1.msra.mxu0 0.0
    %1778 = vmatprep.subr.mxu0 0.0
    %1779 = vmatpush1.msra.mxu0 0.0
    %1780 = vmatprep.subr.mxu0 0.0
    %1781 = vmatpush1.msra.mxu0 0.0
    %1782 = vmatprep.subr.mxu0 0.0
    %1783 = vmatpush1.msra.mxu0 0.0
    %1784 = vmatprep.subr.mxu0 0.0
    %1785 = vmatpush1.msra.mxu0 0.0
    %1786 = vmatprep.subr.mxu0 0.0
    %1787 = vmatpush1.msra.mxu0 0.0
    %1788 = vmatprep.subr.mxu0 0.0
    %1789 = vmatpush1.msra.mxu0 0.0
    %1790 = vmatprep.subr.mxu0 0.0
    %1791 = vmatpush1.msra.mxu0 0.0
    %1792 = vmatprep.subr.mxu0 0.0
    %1793 = vmatpush1.msra.mxu0 0.0
    %1794 = vmatprep.subr.mxu0 0.0
    %1795 = vmatpush1.msra.mxu0 0.0
    %1796 = vmatprep.subr.mxu0 0.0
    %1797 = vmatpush1.msra.mxu0 0.0
    %1798 = vmatprep.subr.mxu0 0.0
    %1799 = vmatpush1.msra.mxu0 0.0
    %1800 = vmatprep.subr.mxu0 0.0
    %1801 = vmatpush1.msra.mxu0 0.0
    %1802 = vmatprep.subr.mxu0 0.0
    %1803 = vmatpush1.msra.mxu0 0.0
    %1804 = vmatprep.subr.mxu0 0.0
    %1805 = vmatpush1.msra.mxu0 0.0
    %1806 = vmatprep.subr.mxu0 0.0
    %1807 = vmatpush1.msra.mxu0 0.0
    %1808 = vmatprep.subr.mxu0 0.0
    %1809 = vmatpush1.msra.mxu0 0.0
    %1810 = vmatprep.subr.mxu0 0.0
    %1811 = vmatpush1.msra.mxu0 0.0
    %1812 = vmatprep.subr.mxu0 0.0
    %1813 = vmatpush1.msra.mxu0 0.0
    %1814 = vmatprep.subr.mxu0 0.0
    %1815 = vmatpush1.msra.mxu0 0.0
    %1816 = vmatprep.mubr.f32.mxu0 0.0
    %1817 = vmatmul.mubr.f32.gmra.mrb[0].mxu0 %v1750
    %v1818 = vpop.f32.mrb[0].mxu0
    %v1819 = vadd.f32 0.0, %v1818
    %v1820 = vpop.f32.mrb[0].mxu0
    %1821 = vdwg.mxu0
    %v1823 = vrot.slane %v1819, 2
    %v1825 = vadd.f32 %v1420, %v1823
    %v1826 = vxor.u32 %v1825, 2147483648
    %v1827 = vmul.f32 %v1826, 1.442695
    %v1828 = vpow.pop %v1827
    %v1829 = vadd.f32 %v1828, 1.0
    %v1830 = vrcp.pop %v1829
    %v1831 = vmul.f32 1.0, %v1830
    %v1832 = vtanh.pop %v1825
    %v1834 = vrot.slane %v1735, 6
    %v1836 = vmul.f32 %v1831, %v1834
    %1838 = vrot.lane.b32.xlu0 %v1832, 64
    %v1839 = vpop.permute.xlu0 %1838
    %v1841 = vmul.f32 %v1831, %v1839
    %1843 = vrot.lane.b32.xlu0 %v1841, 32
    %v1844 = vpop.permute.xlu0 %1843
    %v1846 = vadd.f32 %v1836, %v1844
    %v1847 = vtanh.pop %v1846
    %1849 = vrot.lane.b32.xlu0 %v1847, 64
    %v1850 = vpop.permute.xlu0 %1849
    %v1852 = vmul.f32 %v1831, %v1850
    %1854 = vrot.lane.b32.xlu0 %v1852, 32
    %v1855 = vpop.permute.xlu0 %1854
    %1857 = vst.msk [vmem:[#allocation2] sm:$0xc0] %vm1177, %v1855
    %v1858 = vrot.slane %v1852, 6
    %1859 = vrot.lane.b32.xlu0 %v1858, 32
    %v1860 = vpop.permute.xlu0 %1859
    %v1861 = vsel %vm160, %v1860, 0
    %1863 = vmatprep.subr.mxu0 0.0
    %1864 = vmatpush1.msra.mxu0 %v1334
    %1865 = vmatprep.subr.mxu0 0.0
    %1866 = vmatpush1.msra.mxu0 %v1335
    %1867 = vmatprep.subr.mxu0 0.0
    %1868 = vmatpush1.msra.mxu0 %v1336
    %1869 = vmatprep.subr.mxu0 0.0
    %1870 = vmatpush1.msra.mxu0 %v1337
    %1871 = vmatprep.subr.mxu0 0.0
    %1872 = vmatpush1.msra.mxu0 0.0
    %1873 = vmatprep.subr.mxu0 0.0
    %1874 = vmatpush1.msra.mxu0 0.0
    %1875 = vmatprep.subr.mxu0 0.0
    %1876 = vmatpush1.msra.mxu0 0.0
    %1877 = vmatprep.subr.mxu0 0.0
    %1878 = vmatpush1.msra.mxu0 0.0
    %1879 = vmatprep.subr.mxu0 0.0
    %1880 = vmatpush1.msra.mxu0 0.0
    %1881 = vmatprep.subr.mxu0 0.0
    %1882 = vmatpush1.msra.mxu0 0.0
    %1883 = vmatprep.subr.mxu0 0.0
    %1884 = vmatpush1.msra.mxu0 0.0
    %1885 = vmatprep.subr.mxu0 0.0
    %1886 = vmatpush1.msra.mxu0 0.0
    %1887 = vmatprep.subr.mxu0 0.0
    %1888 = vmatpush1.msra.mxu0 0.0
    %1889 = vmatprep.subr.mxu0 0.0
    %1890 = vmatpush1.msra.mxu0 0.0
    %1891 = vmatprep.subr.mxu0 0.0
    %1892 = vmatpush1.msra.mxu0 0.0
    %1893 = vmatprep.subr.mxu0 0.0
    %1894 = vmatpush1.msra.mxu0 0.0
    %1895 = vmatprep.subr.mxu0 0.0
    %1896 = vmatpush1.msra.mxu0 0.0
    %1897 = vmatprep.subr.mxu0 0.0
    %1898 = vmatpush1.msra.mxu0 0.0
    %1899 = vmatprep.subr.mxu0 0.0
    %1900 = vmatpush1.msra.mxu0 0.0
    %1901 = vmatprep.subr.mxu0 0.0
    %1902 = vmatpush1.msra.mxu0 0.0
    %1903 = vmatprep.subr.mxu0 0.0
    %1904 = vmatpush1.msra.mxu0 0.0
    %1905 = vmatprep.subr.mxu0 0.0
    %1906 = vmatpush1.msra.mxu0 0.0
    %1907 = vmatprep.subr.mxu0 0.0
    %1908 = vmatpush1.msra.mxu0 0.0
    %1909 = vmatprep.subr.mxu0 0.0
    %1910 = vmatpush1.msra.mxu0 0.0
    %1911 = vmatprep.subr.mxu0 0.0
    %1912 = vmatpush1.msra.mxu0 0.0
    %1913 = vmatprep.subr.mxu0 0.0
    %1914 = vmatpush1.msra.mxu0 0.0
    %1915 = vmatprep.subr.mxu0 0.0
    %1916 = vmatpush1.msra.mxu0 0.0
    %1917 = vmatprep.subr.mxu0 0.0
    %1918 = vmatpush1.msra.mxu0 0.0
    %1919 = vmatprep.subr.mxu0 0.0
    %1920 = vmatpush1.msra.mxu0 0.0
    %1921 = vmatprep.subr.mxu0 0.0
    %1922 = vmatpush1.msra.mxu0 0.0
    %1923 = vmatprep.subr.mxu0 0.0
    %1924 = vmatpush1.msra.mxu0 0.0
    %1925 = vmatprep.subr.mxu0 0.0
    %1926 = vmatpush1.msra.mxu0 0.0
    %1927 = vmatprep.mubr.f32.mxu0 0.0
    %1928 = vmatmul.mubr.f32.gmra.mrb[0].mxu0 %v1861
    %v1929 = vpop.f32.mrb[0].mxu0
    %v1930 = vadd.f32 0.0, %v1929
    %v1931 = vpop.f32.mrb[0].mxu0
    %1932 = vdwg.mxu0
    %v1933 = vadd.f32 %v1425, %v1930
    %v1934 = vxor.u32 %v1933, 2147483648
    %v1935 = vmul.f32 %v1934, 1.442695
    %v1936 = vpow.pop %v1935
    %v1937 = vadd.f32 %v1936, 1.0
    %v1938 = vrcp.pop %v1937
    %v1939 = vmul.f32 1.0, %v1938
    %v1940 = vtanh.pop %v1933
    %v1942 = vrot.slane %v1846, 6
    %v1944 = vmul.f32 %v1939, %v1942
    %1946 = vrot.lane.b32.xlu0 %v1940, 64
    %v1947 = vpop.permute.xlu0 %1946
    %v1949 = vmul.f32 %v1939, %v1947
    %1951 = vrot.lane.b32.xlu0 %v1949, 32
    %v1952 = vpop.permute.xlu0 %1951
    %v1954 = vadd.f32 %v1944, %v1952
    %v1955 = vtanh.pop %v1954
    %1957 = vrot.lane.b32.xlu0 %v1955, 64
    %v1958 = vpop.permute.xlu0 %1957
    %v1960 = vmul.f32 %v1939, %v1958
    %1962 = vrot.lane.b32.xlu0 %v1960, 32
    %v1963 = vpop.permute.xlu0 %1962
    %1965 = vst.msk [vmem:[#allocation2 + $0x8] sm:$0x3] %vm296, %v1963
    %v1966 = vsel %vm160, %v1963, 0
    %1968 = vmatprep.subr.mxu0 0.0
    %1969 = vmatpush1.msra.mxu0 %v1334
    %1970 = vmatprep.subr.mxu0 0.0
    %1971 = vmatpush1.msra.mxu0 %v1335
    %1972 = vmatprep.subr.mxu0 0.0
    %1973 = vmatpush1.msra.mxu0 %v1336
    %1974 = vmatprep.subr.mxu0 0.0
    %1975 = vmatpush1.msra.mxu0 %v1337
    %1976 = vmatprep.subr.mxu0 0.0
    %1977 = vmatpush1.msra.mxu0 0.0
    %1978 = vmatprep.subr.mxu0 0.0
    %1979 = vmatpush1.msra.mxu0 0.0
    %1980 = vmatprep.subr.mxu0 0.0
    %1981 = vmatpush1.msra.mxu0 0.0
    %1982 = vmatprep.subr.mxu0 0.0
    %1983 = vmatpush1.msra.mxu0 0.0
    %1984 = vmatprep.subr.mxu0 0.0
    %1985 = vmatpush1.msra.mxu0 0.0
    %1986 = vmatprep.subr.mxu0 0.0
    %1987 = vmatpush1.msra.mxu0 0.0
    %1988 = vmatprep.subr.mxu0 0.0
    %1989 = vmatpush1.msra.mxu0 0.0
    %1990 = vmatprep.subr.mxu0 0.0
    %1991 = vmatpush1.msra.mxu0 0.0
    %1992 = vmatprep.subr.mxu0 0.0
    %1993 = vmatpush1.msra.mxu0 0.0
    %1994 = vmatprep.subr.mxu0 0.0
    %1995 = vmatpush1.msra.mxu0 0.0
    %1996 = vmatprep.subr.mxu0 0.0
    %1997 = vmatpush1.msra.mxu0 0.0
    %1998 = vmatprep.subr.mxu0 0.0
    %1999 = vmatpush1.msra.mxu0 0.0
    %2000 = vmatprep.subr.mxu0 0.0
    %2001 = vmatpush1.msra.mxu0 0.0
    %2002 = vmatprep.subr.mxu0 0.0
    %2003 = vmatpush1.msra.mxu0 0.0
    %2004 = vmatprep.subr.mxu0 0.0
    %2005 = vmatpush1.msra.mxu0 0.0
    %2006 = vmatprep.subr.mxu0 0.0
    %2007 = vmatpush1.msra.mxu0 0.0
    %2008 = vmatprep.subr.mxu0 0.0
    %2009 = vmatpush1.msra.mxu0 0.0
    %2010 = vmatprep.subr.mxu0 0.0
    %2011 = vmatpush1.msra.mxu0 0.0
    %2012 = vmatprep.subr.mxu0 0.0
    %2013 = vmatpush1.msra.mxu0 0.0
    %2014 = vmatprep.subr.mxu0 0.0
    %2015 = vmatpush1.msra.mxu0 0.0
    %2016 = vmatprep.subr.mxu0 0.0
    %2017 = vmatpush1.msra.mxu0 0.0
    %2018 = vmatprep.subr.mxu0 0.0
    %2019 = vmatpush1.msra.mxu0 0.0
    %2020 = vmatprep.subr.mxu0 0.0
    %2021 = vmatpush1.msra.mxu0 0.0
    %2022 = vmatprep.subr.mxu0 0.0
    %2023 = vmatpush1.msra.mxu0 0.0
    %2024 = vmatprep.subr.mxu0 0.0
    %2025 = vmatpush1.msra.mxu0 0.0
    %2026 = vmatprep.subr.mxu0 0.0
    %2027 = vmatpush1.msra.mxu0 0.0
    %2028 = vmatprep.subr.mxu0 0.0
    %2029 = vmatpush1.msra.mxu0 0.0
    %2030 = vmatprep.subr.mxu0 0.0
    %2031 = vmatpush1.msra.mxu0 0.0
    %2032 = vmatprep.mubr.f32.mxu0 0.0
    %2033 = vmatmul.mubr.f32.gmra.mrb[0].mxu0 %v1966
    %v2034 = vpop.f32.mrb[0].mxu0
    %v2035 = vadd.f32 0.0, %v2034
    %v2036 = vpop.f32.mrb[0].mxu0
    %2037 = vdwg.mxu0
    %v2039 = vrot.slane %v2035, 6
    %v2041 = vadd.f32 %v1425, %v2039
    %v2042 = vxor.u32 %v2041, 2147483648
    %v2043 = vmul.f32 %v2042, 1.442695
    %v2044 = vpow.pop %v2043
    %v2045 = vadd.f32 %v2044, 1.0
    %v2046 = vrcp.pop %v2045
    %v2047 = vmul.f32 1.0, %v2046
    %v2048 = vtanh.pop %v2041
    %v2050 = vrot.slane %v1954, 6
    %v2052 = vmul.f32 %v2047, %v2050
    %2054 = vrot.lane.b32.xlu0 %v2048, 64
    %v2055 = vpop.permute.xlu0 %2054
    %v2057 = vmul.f32 %v2047, %v2055
    %2059 = vrot.lane.b32.xlu0 %v2057, 32
    %v2060 = vpop.permute.xlu0 %2059
    %v2062 = vadd.f32 %v2052, %v2060
    %v2063 = vtanh.pop %v2062
    %2065 = vrot.lane.b32.xlu0 %v2063, 64
    %v2066 = vpop.permute.xlu0 %2065
    %v2068 = vmul.f32 %v2047, %v2066
    %2070 = vrot.lane.b32.xlu0 %v2068, 32
    %v2071 = vpop.permute.xlu0 %2070
    %2073 = vst.msk [vmem:[#allocation2 + $0x8] sm:$0xc] %vm585, %v2071
    %v2074 = vrot.slane %v2068, 2
    %2075 = vrot.lane.b32.xlu0 %v2074, 32
    %v2076 = vpop.permute.xlu0 %2075
    %v2077 = vsel %vm160, %v2076, 0
    %2079 = vmatprep.subr.mxu0 0.0
    %2080 = vmatpush1.msra.mxu0 %v1334
    %2081 = vmatprep.subr.mxu0 0.0
    %2082 = vmatpush1.msra.mxu0 %v1335
    %2083 = vmatprep.subr.mxu0 0.0
    %2084 = vmatpush1.msra.mxu0 %v1336
    %2085 = vmatprep.subr.mxu0 0.0
    %2086 = vmatpush1.msra.mxu0 %v1337
    %2087 = vmatprep.subr.mxu0 0.0
    %2088 = vmatpush1.msra.mxu0 0.0
    %2089 = vmatprep.subr.mxu0 0.0
    %2090 = vmatpush1.msra.mxu0 0.0
    %2091 = vmatprep.subr.mxu0 0.0
    %2092 = vmatpush1.msra.mxu0 0.0
    %2093 = vmatprep.subr.mxu0 0.0
    %2094 = vmatpush1.msra.mxu0 0.0
    %2095 = vmatprep.subr.mxu0 0.0
    %2096 = vmatpush1.msra.mxu0 0.0
    %2097 = vmatprep.subr.mxu0 0.0
    %2098 = vmatpush1.msra.mxu0 0.0
    %2099 = vmatprep.subr.mxu0 0.0
    %2100 = vmatpush1.msra.mxu0 0.0
    %2101 = vmatprep.subr.mxu0 0.0
    %2102 = vmatpush1.msra.mxu0 0.0
    %2103 = vmatprep.subr.mxu0 0.0
    %2104 = vmatpush1.msra.mxu0 0.0
    %2105 = vmatprep.subr.mxu0 0.0
    %2106 = vmatpush1.msra.mxu0 0.0
    %2107 = vmatprep.subr.mxu0 0.0
    %2108 = vmatpush1.msra.mxu0 0.0
    %2109 = vmatprep.subr.mxu0 0.0
    %2110 = vmatpush1.msra.mxu0 0.0
    %2111 = vmatprep.subr.mxu0 0.0
    %2112 = vmatpush1.msra.mxu0 0.0
    %2113 = vmatprep.subr.mxu0 0.0
    %2114 = vmatpush1.msra.mxu0 0.0
    %2115 = vmatprep.subr.mxu0 0.0
    %2116 = vmatpush1.msra.mxu0 0.0
    %2117 = vmatprep.subr.mxu0 0.0
    %2118 = vmatpush1.msra.mxu0 0.0
    %2119 = vmatprep.subr.mxu0 0.0
    %2120 = vmatpush1.msra.mxu0 0.0
    %2121 = vmatprep.subr.mxu0 0.0
    %2122 = vmatpush1.msra.mxu0 0.0
    %2123 = vmatprep.subr.mxu0 0.0
    %2124 = vmatpush1.msra.mxu0 0.0
    %2125 = vmatprep.subr.mxu0 0.0
    %2126 = vmatpush1.msra.mxu0 0.0
    %2127 = vmatprep.subr.mxu0 0.0
    %2128 = vmatpush1.msra.mxu0 0.0
    %2129 = vmatprep.subr.mxu0 0.0
    %2130 = vmatpush1.msra.mxu0 0.0
    %2131 = vmatprep.subr.mxu0 0.0
    %2132 = vmatpush1.msra.mxu0 0.0
    %2133 = vmatprep.subr.mxu0 0.0
    %2134 = vmatpush1.msra.mxu0 0.0
    %2135 = vmatprep.subr.mxu0 0.0
    %2136 = vmatpush1.msra.mxu0 0.0
    %2137 = vmatprep.subr.mxu0 0.0
    %2138 = vmatpush1.msra.mxu0 0.0
    %2139 = vmatprep.subr.mxu0 0.0
    %2140 = vmatpush1.msra.mxu0 0.0
    %2141 = vmatprep.subr.mxu0 0.0
    %2142 = vmatpush1.msra.mxu0 0.0
    %2143 = vmatprep.mubr.f32.mxu0 0.0
    %2144 = vmatmul.mubr.f32.gmra.mrb[0].mxu0 %v2077
    %v2145 = vpop.f32.mrb[0].mxu0
    %v2146 = vadd.f32 0.0, %v2145
    %v2147 = vpop.f32.mrb[0].mxu0
    %2148 = vdwg.mxu0
    %v2150 = vrot.slane %v2146, 4
    %v2152 = vadd.f32 %v1425, %v2150
    %v2153 = vxor.u32 %v2152, 2147483648
    %v2154 = vmul.f32 %v2153, 1.442695
    %v2155 = vpow.pop %v2154
    %v2156 = vadd.f32 %v2155, 1.0
    %v2157 = vrcp.pop %v2156
    %v2158 = vmul.f32 1.0, %v2157
    %v2159 = vtanh.pop %v2152
    %v2161 = vrot.slane %v2062, 6
    %v2163 = vmul.f32 %v2158, %v2161
    %2165 = vrot.lane.b32.xlu0 %v2159, 64
    %v2166 = vpop.permute.xlu0 %2165
    %v2168 = vmul.f32 %v2158, %v2166
    %2170 = vrot.lane.b32.xlu0 %v2168, 32
    %v2171 = vpop.permute.xlu0 %2170
    %v2173 = vadd.f32 %v2163, %v2171
    %v2174 = vtanh.pop %v2173
    %2176 = vrot.lane.b32.xlu0 %v2174, 64
    %v2177 = vpop.permute.xlu0 %2176
    %v2179 = vmul.f32 %v2158, %v2177
    %2181 = vrot.lane.b32.xlu0 %v2179, 32
    %v2182 = vpop.permute.xlu0 %2181
    %2184 = vst.msk [vmem:[#allocation2 + $0x8] sm:$0x30] %vm881, %v2182
    %v2185 = vrot.slane %v2179, 4
    %2186 = vrot.lane.b32.xlu0 %v2185, 32
    %v2187 = vpop.permute.xlu0 %2186
    %v2188 = vsel %vm160, %v2187, 0
    %2190 = vmatprep.subr.mxu0 0.0
    %2191 = vmatpush1.msra.mxu0 %v1334
    %2192 = vmatprep.subr.mxu0 0.0
    %2193 = vmatpush1.msra.mxu0 %v1335
    %2194 = vmatprep.subr.mxu0 0.0
    %2195 = vmatpush1.msra.mxu0 %v1336
    %2196 = vmatprep.subr.mxu0 0.0
    %2197 = vmatpush1.msra.mxu0 %v1337
    %2198 = vmatprep.subr.mxu0 0.0
    %2199 = vmatpush1.msra.mxu0 0.0
    %2200 = vmatprep.subr.mxu0 0.0
    %2201 = vmatpush1.msra.mxu0 0.0
    %2202 = vmatprep.subr.mxu0 0.0
    %2203 = vmatpush1.msra.mxu0 0.0
    %2204 = vmatprep.subr.mxu0 0.0
    %2205 = vmatpush1.msra.mxu0 0.0
    %2206 = vmatprep.subr.mxu0 0.0
    %2207 = vmatpush1.msra.mxu0 0.0
    %2208 = vmatprep.subr.mxu0 0.0
    %2209 = vmatpush1.msra.mxu0 0.0
    %2210 = vmatprep.subr.mxu0 0.0
    %2211 = vmatpush1.msra.mxu0 0.0
    %2212 = vmatprep.subr.mxu0 0.0
    %2213 = vmatpush1.msra.mxu0 0.0
    %2214 = vmatprep.subr.mxu0 0.0
    %2215 = vmatpush1.msra.mxu0 0.0
    %2216 = vmatprep.subr.mxu0 0.0
    %2217 = vmatpush1.msra.mxu0 0.0
    %2218 = vmatprep.subr.mxu0 0.0
    %2219 = vmatpush1.msra.mxu0 0.0
    %2220 = vmatprep.subr.mxu0 0.0
    %2221 = vmatpush1.msra.mxu0 0.0
    %2222 = vmatprep.subr.mxu0 0.0
    %2223 = vmatpush1.msra.mxu0 0.0
    %2224 = vmatprep.subr.mxu0 0.0
    %2225 = vmatpush1.msra.mxu0 0.0
    %2226 = vmatprep.subr.mxu0 0.0
    %2227 = vmatpush1.msra.mxu0 0.0
    %2228 = vmatprep.subr.mxu0 0.0
    %2229 = vmatpush1.msra.mxu0 0.0
    %2230 = vmatprep.subr.mxu0 0.0
    %2231 = vmatpush1.msra.mxu0 0.0
    %2232 = vmatprep.subr.mxu0 0.0
    %2233 = vmatpush1.msra.mxu0 0.0
    %2234 = vmatprep.subr.mxu0 0.0
    %2235 = vmatpush1.msra.mxu0 0.0
    %2236 = vmatprep.subr.mxu0 0.0
    %2237 = vmatpush1.msra.mxu0 0.0
    %2238 = vmatprep.subr.mxu0 0.0
    %2239 = vmatpush1.msra.mxu0 0.0
    %2240 = vmatprep.subr.mxu0 0.0
    %2241 = vmatpush1.msra.mxu0 0.0
    %2242 = vmatprep.subr.mxu0 0.0
    %2243 = vmatpush1.msra.mxu0 0.0
    %2244 = vmatprep.subr.mxu0 0.0
    %2245 = vmatpush1.msra.mxu0 0.0
    %2246 = vmatprep.subr.mxu0 0.0
    %2247 = vmatpush1.msra.mxu0 0.0
    %2248 = vmatprep.subr.mxu0 0.0
    %2249 = vmatpush1.msra.mxu0 0.0
    %2250 = vmatprep.subr.mxu0 0.0
    %2251 = vmatpush1.msra.mxu0 0.0
    %2252 = vmatprep.subr.mxu0 0.0
    %2253 = vmatpush1.msra.mxu0 0.0
    %2254 = vmatprep.mubr.f32.mxu0 0.0
    %2255 = vmatmul.mubr.f32.gmra.mrb[0].mxu0 %v2188
    %v2256 = vpop.f32.mrb[0].mxu0
    %v2257 = vadd.f32 0.0, %v2256
    %v2258 = vpop.f32.mrb[0].mxu0
    %2259 = vdwg.mxu0
    %v2261 = vrot.slane %v2257, 2
    %v2263 = vadd.f32 %v1425, %v2261
    %v2264 = vxor.u32 %v2263, 2147483648
    %v2265 = vmul.f32 %v2264, 1.442695
    %v2266 = vpow.pop %v2265
    %v2267 = vadd.f32 %v2266, 1.0
    %v2268 = vrcp.pop %v2267
    %v2269 = vmul.f32 1.0, %v2268
    %v2270 = vtanh.pop %v2263
    %v2272 = vrot.slane %v2173, 6
    %v2274 = vmul.f32 %v2269, %v2272
    %2276 = vrot.lane.b32.xlu0 %v2270, 64
    %v2277 = vpop.permute.xlu0 %2276
    %v2279 = vmul.f32 %v2269, %v2277
    %2281 = vrot.lane.b32.xlu0 %v2279, 32
    %v2282 = vpop.permute.xlu0 %2281
    %v2284 = vadd.f32 %v2274, %v2282
    %v2285 = vtanh.pop %v2284
    %2287 = vrot.lane.b32.xlu0 %v2285, 64
    %v2288 = vpop.permute.xlu0 %2287
    %v2290 = vmul.f32 %v2269, %v2288
    %2292 = vrot.lane.b32.xlu0 %v2290, 32
    %v2293 = vpop.permute.xlu0 %2292
    %2295 = vst.msk [vmem:[#allocation2 + $0x8] sm:$0xc0] %vm1177, %v2293
    %v2296 = vld [vmem:[#allocation2 + $0xe] sm:$0x3]
    %v2297 = vld [vmem:[%s7] sm:$0xff]
    %v2298 = vld [vmem:[%s7 + $0x8] sm:$0xff]
    %v2299 = vld [vmem:[%s7 + $0x10] sm:$0xff]
    %v2300 = vld [vmem:[%s7 + $0x18] sm:$0xff]
    %v2301 = vld [vmem:[#allocation3] sm:$0x1]
    %v2303 = vlaneseq
    %v2304 = vshrl.u32 %v2303, 7
    %v2305 = vsub.s32 0, %v2304
    %v2306 = vrot.slane %v2301, %v2305
    %v2309 = vsel %vm160, %v2296, 0
    %2311 = vmatprep.subr.mxu0 0.0
    %2312 = vmatpush1.msra.mxu0 %v2297
    %2313 = vmatprep.subr.mxu0 0.0
    %2314 = vmatpush1.msra.mxu0 %v2298
    %2315 = vmatprep.subr.mxu0 0.0
    %2316 = vmatpush1.msra.mxu0 %v2299
    %2317 = vmatprep.subr.mxu0 0.0
    %2318 = vmatpush1.msra.mxu0 %v2300
    %2319 = vmatprep.subr.mxu0 0.0
    %2320 = vmatpush1.msra.mxu0 0.0
    %2321 = vmatprep.subr.mxu0 0.0
    %2322 = vmatpush1.msra.mxu0 0.0
    %2323 = vmatprep.subr.mxu0 0.0
    %2324 = vmatpush1.msra.mxu0 0.0
    %2325 = vmatprep.subr.mxu0 0.0
    %2326 = vmatpush1.msra.mxu0 0.0
    %2327 = vmatprep.subr.mxu0 0.0
    %2328 = vmatpush1.msra.mxu0 0.0
    %2329 = vmatprep.subr.mxu0 0.0
    %2330 = vmatpush1.msra.mxu0 0.0
    %2331 = vmatprep.subr.mxu0 0.0
    %2332 = vmatpush1.msra.mxu0 0.0
    %2333 = vmatprep.subr.mxu0 0.0
    %2334 = vmatpush1.msra.mxu0 0.0
    %2335 = vmatprep.subr.mxu0 0.0
    %2336 = vmatpush1.msra.mxu0 0.0
    %2337 = vmatprep.subr.mxu0 0.0
    %2338 = vmatpush1.msra.mxu0 0.0
    %2339 = vmatprep.subr.mxu0 0.0
    %2340 = vmatpush1.msra.mxu0 0.0
    %2341 = vmatprep.subr.mxu0 0.0
    %2342 = vmatpush1.msra.mxu0 0.0
    %2343 = vmatprep.subr.mxu0 0.0
    %2344 = vmatpush1.msra.mxu0 0.0
    %2345 = vmatprep.subr.mxu0 0.0
    %2346 = vmatpush1.msra.mxu0 0.0
    %2347 = vmatprep.subr.mxu0 0.0
    %2348 = vmatpush1.msra.mxu0 0.0
    %2349 = vmatprep.subr.mxu0 0.0
    %2350 = vmatpush1.msra.mxu0 0.0
    %2351 = vmatprep.subr.mxu0 0.0
    %2352 = vmatpush1.msra.mxu0 0.0
    %2353 = vmatprep.subr.mxu0 0.0
    %2354 = vmatpush1.msra.mxu0 0.0
    %2355 = vmatprep.subr.mxu0 0.0
    %2356 = vmatpush1.msra.mxu0 0.0
    %2357 = vmatprep.subr.mxu0 0.0
    %2358 = vmatpush1.msra.mxu0 0.0
    %2359 = vmatprep.subr.mxu0 0.0
    %2360 = vmatpush1.msra.mxu0 0.0
    %2361 = vmatprep.subr.mxu0 0.0
    %2362 = vmatpush1.msra.mxu0 0.0
    %2363 = vmatprep.subr.mxu0 0.0
    %2364 = vmatpush1.msra.mxu0 0.0
    %2365 = vmatprep.subr.mxu0 0.0
    %2366 = vmatpush1.msra.mxu0 0.0
    %2367 = vmatprep.subr.mxu0 0.0
    %2368 = vmatpush1.msra.mxu0 0.0
    %2369 = vmatprep.subr.mxu0 0.0
    %2370 = vmatpush1.msra.mxu0 0.0
    %2371 = vmatprep.subr.mxu0 0.0
    %2372 = vmatpush1.msra.mxu0 0.0
    %2373 = vmatprep.subr.mxu0 0.0
    %2374 = vmatpush1.msra.mxu0 0.0
    %2375 = vmatprep.mubr.f32.mxu0 0.0
    %2376 = vmatmul.mubr.f32.gmra.mrb[0].mxu0 %v2309
    %v2377 = vpop.f32.mrb[0].mxu0
    %v2378 = vadd.f32 %v2306, %v2377
    %v2379 = vpop.f32.mrb[0].mxu0
    %2380 = vdwg.mxu0
    %v2383 = vunpack.c.l.s4 1966171168
    %v2384 = vunpack.c.0.s8 %v2383
    %v2385 = vlaneseq
    %v2386 = vshrl.u32 %v2385, 7
    %v2387 = vsub.s32 %v2384, %v2386
    %v2388 = vrot.slane %v2378, %v2387
    %v2389 = vcombine.high %v2388, %v2388
    %v2391 = vunpack.c.l.s4 1966171168
    %v2392 = vunpack.c.0.s8 %v2391
    %v2393 = vlaneseq
    %v2394 = vshrl.u32 %v2393, 7
    %v2395 = vsub.s32 %v2392, %v2394
    %v2396 = vrot.slane %v2388, %v2395
    %v2398 = vunpack.c.l.s4 1966171168
    %v2399 = vunpack.c.0.s8 %v2398
    %v2400 = vlaneseq
    %v2401 = vshrl.u32 %v2400, 7
    %v2402 = vsub.s32 %v2399, %v2401
    %v2403 = vrot.slane %v2389, %v2402
    %vm2406 = vcmask 0
    %2407 = vst.msk [vmem:[%s9] sm:$0x1] %vm2406, %v2396
    %2408 = vst.msk [vmem:[%s9 + $0x1] sm:$0x1] %vm2406, %v2403
    // Predicated region
    $region46: #{tpu_custom_call.1} parent=1 // pred_check
      _
    $region47: #{tpu_custom_call.1} parent=1 // pred_check_branch
      %2410 = sbr.rel (0) target = $region49
    $region48: #{tpu_custom_call.1} parent=1 // pred_region
      _
    $region49: #{tpu_custom_call.1} parent=1 // pred_fallthru
      _
    // Predicated region
    $region50: #{tpu_custom_call.1} parent=1 // pred_check
      _
    $region51: #{tpu_custom_call.1} parent=1 // pred_check_branch
      %2412 = sbr.rel (0) target = $region53
    $region52: #{tpu_custom_call.1} parent=1 // pred_region
      _
    $region53: #{tpu_custom_call.1} parent=1 // pred_fallthru
      _
    %2413 = vsyncpa [#allocation5], 1
    %2414 = vsyncpa [#allocation7], 1

</llo_original>
